<compile_context>
chip_gen: v5e
topology: v5e:2x2
jax: 0.10.0
libtpu: 0.0.40
codegen_flags: <defaults>
</compile_context>

<pallas_src>
import jax
import jax.numpy as jnp
from jax import lax
from jax.experimental import pallas as pl
from jax.experimental.pallas import tpu as pltpu

SINKHORN_ITERS = 50
SINKHORN_EPS = 0.1


def _vmem_capacity_bytes():
    """Physical per-core VMEM; conservative 64 MiB fallback (v7x)."""
    try:
        info = pltpu.get_tpu_info()
        cap = getattr(info, "vmem_capacity_bytes", None)
        if cap:
            return int(cap)
    except Exception:
        pass
    return 64 * 1024 * 1024


def _choose_group_size(B, N, M, vmem_cap):
    """Largest divisor of B (<= 8) keeping the per-step working set inside a
    fraction of physical VMEM, with >= 2 grid steps (preferring an even step
    count so the v7x megacore can split the batch-group axis evenly)."""
    # Steady-state: bf16 kmat; prologue/epilogue transients: ~2 f32 NxM arrays.
    per_group = N * M * (2 + 2 * 4)
    budget = max(int(vmem_cap * 0.45), per_group)
    cap = min(max(budget // per_group, 1), 8, B)
    candidates = [g for g in range(1, cap + 1)
                  if B % g == 0 and B // g >= min(2, B)]
    if not candidates:
        return 1
    even = [g for g in candidates if (B // g) % 2 == 0]
    pool = even if even else candidates
    return max(pool)


def _vmem_bytes_estimate(G, N, M):
    n_pad = (N + 7) // 8 * 8
    m_pad = (M + 127) // 128 * 128
    # Double-buffered I/O (template pads 3->128 lanes, source pads 3->8 sublanes).
    io = 2 * (G * n_pad * 128 * 4 + G * 8 * m_pad * 4) + 2 * G * 8 * 128 * 4
    # bf16 kmat resident across the loop + ~2 f32 NxM transients in prologue.
    tmp = G * N * M * 2 + 2 * G * N * M * 4
    return io + tmp + (1 << 20)


def earth_mover_distance(template, source):
    """Per-batch approximate EMD cost, shape (B,)."""
    B, N, _ = template.shape
    _, M, _ = source.shape
    vmem_cap = _vmem_capacity_bytes()
    G = _choose_group_size(B, N, M, vmem_cap)
    steps = B // G

    # Lane-major source points: (B, 3, M).
    # TODO(synk): also feed the template lane-major (B, 3, N) and build d2 via
    # an augmented K=5 MXU contraction to remove the 3->128 lane padding on the
    # template DMA at large N.
    source_t = jnp.transpose(source, (0, 2, 1))

    def kernel(t_ref, s_ref, out_ref):
        t = t_ref[...].astype(jnp.float32)          # (G, N, 3)
        s = s_ref[...].astype(jnp.float32)          # (G, 3, M)

        # Squared norms -- both land in the layout d2 needs, no transposes.
        t2 = jnp.sum(t * t, axis=2, keepdims=True)  # (G, N, 1)
        s2 = jnp.sum(s * s, axis=1, keepdims=True)  # (G, 1, M)

        def pairwise_dist():
            # Cross term as 3 unrolled broadcast multiply-adds on the VPU
            # (avoids a degenerate K=3 MXU contraction).
            cross = (t[:, :, 0:1] * s[:, 0:1, :]
                     + t[:, :, 1:2] * s[:, 1:2, :]
                     + t[:, :, 2:3] * s[:, 2:3, :])          # (G, N, M)
            return jnp.sqrt(jnp.maximum(t2 + s2 - 2.0 * cross, 0.0))

        # TODO(synk): the reference CUDA `earth_mover_distance` uses an
        # auction / approx-match algorithm; here the transport plan is
        # approximated with entropic-regularized Sinkhorn (uniform unit
        # marginals).  Row-min shift stabilizes exp() underflow; the converged
        # plan is invariant to per-row scaling of K (absorbed into u).
        d = pairwise_dist()                                   # (G, N, M) f32
        d_min = jnp.min(d, axis=2, keepdims=True)             # (G, N, 1)
        kmat = jnp.exp((d - d_min) * (-1.0 / SINKHORN_EPS)).astype(jnp.bfloat16)
        # `d` dies here: only the bf16 kmat + (N,1)/(1,M) vectors stay live
        # across the 50-iteration loop (steady-state VMEM ~= 1x bf16 NxM).
        # TODO(synk): if the prologue chain (cross/d2/d) ever sets the VMEM
        # peak, build kmat in M-chunks with a short pl.loop.

        tiny = jnp.float32(1e-20)
        u0 = jnp.ones((G, N, 1), jnp.float32)
        v0 = jnp.ones((G, 1, M), jnp.float32)

        def body(_, carry):
            u, v = carry
            # K v   : packed bf16 VPU multiply + f32 lane reduce (no MXU matvec).
            # The multiply/reduce is expressed so Mosaic can fuse it without
            # materializing an NxM product.
            kv = jnp.sum((kmat * v.astype(jnp.bfloat16)).astype(jnp.float32),
                         axis=2, keepdims=True)               # (G, N, 1)
            u = pl.reciprocal(kv + tiny, approx=False)
            # K^T u : packed bf16 multiply + f32 sublane reduce (kmat stays in
            # native layout, no per-iteration transpose).
            ktu = jnp.sum((kmat * u.astype(jnp.bfloat16)).astype(jnp.float32),
                          axis=1, keepdims=True)              # (G, 1, M)
            v = pl.reciprocal(ktu + tiny, approx=False)
            return u, v

        u, v = lax.fori_loop(0, SINKHORN_ITERS, body, (u0, v0))

        # Recompute d (one cheap extra pass) rather than pinning a second f32
        # NxM array across the whole loop.  Cost sum_ij u_i K_ij v_j d_ij is
        # fused in f32 -- the transport plan is never materialized.
        d = pairwise_dist()
        row = jnp.sum(kmat.astype(jnp.float32) * d * v, axis=2, keepdims=True)
        cost = jnp.sum(row * u, axis=1, keepdims=True)        # (G, 1, 1)

        # Lane-dense scalar writeback: one 128-lane row per batch element.
        out_ref[0] = jnp.broadcast_to(cost, (G, 1, 128)).astype(out_ref.dtype)

    est = _vmem_bytes_estimate(G, N, M)
    # Always set the scoped-VMEM limit (v5e's default is only 16 MiB) and
    # clamp it to the physical per-core capacity (64 MiB on v7x).
    vmem_limit = int(min(max(est * 1.3, 32 * 1024 * 1024),
                         int(vmem_cap * 0.85)))
    # TODO(synk): for N*M too large even for bf16 kmat in VMEM, stream
    # double-buffered M-chunks of kmat from HBM with pltpu.emit_pipeline.

    out = pl.pallas_call(
        kernel,
        out_shape=jax.ShapeDtypeStruct((steps, G, 1, 128), jnp.float32),
        grid_spec=pltpu.PrefetchScalarGridSpec(
            num_scalar_prefetch=0,
            grid=(steps,),
            in_specs=[
                pl.BlockSpec((G, N, 3), lambda b: (b, 0, 0)),
                pl.BlockSpec((G, 3, M), lambda b: (b, 0, 0)),
            ],
            out_specs=pl.BlockSpec((1, G, 1, 128), lambda b: (b, 0, 0, 0)),
        ),
        compiler_params=pltpu.CompilerParams(
            dimension_semantics=("parallel",),
            vmem_limit_bytes=vmem_limit,
        ),
    )(template, source_t)

    return out[:, :, 0, 0].reshape(-1)   # (B,)


def emd_loss(template, source):
    # torch.mean(earth_mover_distance(template, source)) / template.size()[1]
    # TODO(synk): forward-only; no custom_vjp is defined for jax.grad.
    per_batch = earth_mover_distance(template, source)
    return jnp.mean(per_batch) / template.shape[1]


if __name__ == "__main__":
    key = jax.random.PRNGKey(0)
    k1, k2 = jax.random.split(key)
    B, N = 2, 128
    template = jax.random.normal(k1, (B, N, 3), dtype=jnp.float32)
    source = jax.random.normal(k2, (B, N, 3), dtype=jnp.float32)

    loss = jax.jit(emd_loss)(template, source)
    jax.block_until_ready(loss)
    print("KERNEL_OK")
</pallas_src>

<mosaic_0001>
module attributes {stable_mosaic.version = 11 : i64} {
  func.func @kernel(%arg0: i32, %arg1: memref<1x128x3xf32, #tpu.memory_space<vmem>>, %arg2: memref<1x3x128xf32, #tpu.memory_space<vmem>>, %arg3: memref<1x1x1x128xf32, #tpu.memory_space<vmem>>) attributes {dimension_semantics = [#tpu.dimension_semantics<parallel>], iteration_bounds = array<i64: 2>, scalar_prefetch = 0 : i64, scratch_operands = 0 : i64, tpu.core_type = #tpu.core_type<tc>, window_params = [{transform_indices = @transform_0, window_bounds = array<i64: 1, 128, 3>}, {transform_indices = @transform_1, window_bounds = array<i64: 1, 3, 128>}, {transform_indices = @transform_2, window_bounds = array<i64: 1, 1, 1, 128>}]} {
    %c0 = arith.constant 0 : index
    %c0_0 = arith.constant 0 : index
    %c0_1 = arith.constant 0 : index
    %0 = vector.load %arg1[%c0, %c0_0, %c0_1] : memref<1x128x3xf32, #tpu.memory_space<vmem>>, vector<1x128x3xf32>
    %c0_2 = arith.constant 0 : index
    %c0_3 = arith.constant 0 : index
    %c0_4 = arith.constant 0 : index
    %1 = vector.load %arg2[%c0_2, %c0_3, %c0_4] : memref<1x3x128xf32, #tpu.memory_space<vmem>>, vector<1x3x128xf32>
    %2 = arith.mulf %0, %0 : vector<1x128x3xf32>
    %cst = arith.constant dense<0.000000e+00> : vector<1x128xf32>
    %3 = vector.multi_reduction <add>, %2, %cst [2] : vector<1x128x3xf32> to vector<1x128xf32>
    %4 = vector.shape_cast %3 : vector<1x128xf32> to vector<1x128x1xf32>
    %5 = arith.mulf %1, %1 : vector<1x3x128xf32>
    %cst_5 = arith.constant dense<0.000000e+00> : vector<1x128xf32>
    %6 = vector.multi_reduction <add>, %5, %cst_5 [1] : vector<1x3x128xf32> to vector<1x128xf32>
    %7 = vector.shape_cast %6 : vector<1x128xf32> to vector<1x1x128xf32>
    %8 = vector.extract_strided_slice %0 {offsets = [0, 0, 0], sizes = [1, 128, 1], strides = [1, 1, 1]} : vector<1x128x3xf32> to vector<1x128x1xf32>
    %9 = vector.extract_strided_slice %1 {offsets = [0, 0, 0], sizes = [1, 1, 128], strides = [1, 1, 1]} : vector<1x3x128xf32> to vector<1x1x128xf32>
    %10 = vector.broadcast %8 : vector<1x128x1xf32> to vector<1x128x128xf32>
    %11 = vector.broadcast %9 : vector<1x1x128xf32> to vector<1x128x128xf32>
    %12 = arith.mulf %10, %11 : vector<1x128x128xf32>
    %13 = vector.extract_strided_slice %0 {offsets = [0, 0, 1], sizes = [1, 128, 1], strides = [1, 1, 1]} : vector<1x128x3xf32> to vector<1x128x1xf32>
    %14 = vector.extract_strided_slice %1 {offsets = [0, 1, 0], sizes = [1, 1, 128], strides = [1, 1, 1]} : vector<1x3x128xf32> to vector<1x1x128xf32>
    %15 = vector.broadcast %13 : vector<1x128x1xf32> to vector<1x128x128xf32>
    %16 = vector.broadcast %14 : vector<1x1x128xf32> to vector<1x128x128xf32>
    %17 = arith.mulf %15, %16 : vector<1x128x128xf32>
    %18 = arith.addf %12, %17 : vector<1x128x128xf32>
    %19 = vector.extract_strided_slice %0 {offsets = [0, 0, 2], sizes = [1, 128, 1], strides = [1, 1, 1]} : vector<1x128x3xf32> to vector<1x128x1xf32>
    %20 = vector.extract_strided_slice %1 {offsets = [0, 2, 0], sizes = [1, 1, 128], strides = [1, 1, 1]} : vector<1x3x128xf32> to vector<1x1x128xf32>
    %21 = vector.broadcast %19 : vector<1x128x1xf32> to vector<1x128x128xf32>
    %22 = vector.broadcast %20 : vector<1x1x128xf32> to vector<1x128x128xf32>
    %23 = arith.mulf %21, %22 : vector<1x128x128xf32>
    %24 = arith.addf %18, %23 : vector<1x128x128xf32>
    %25 = vector.broadcast %4 : vector<1x128x1xf32> to vector<1x128x128xf32>
    %26 = vector.broadcast %7 : vector<1x1x128xf32> to vector<1x128x128xf32>
    %27 = arith.addf %25, %26 : vector<1x128x128xf32>
    %cst_6 = arith.constant 2.000000e+00 : f32
    %28 = vector.broadcast %cst_6 : f32 to vector<1x128x128xf32>
    %29 = arith.mulf %28, %24 : vector<1x128x128xf32>
    %30 = arith.subf %27, %29 : vector<1x128x128xf32>
    %cst_7 = arith.constant 0.000000e+00 : f32
    %31 = vector.broadcast %cst_7 : f32 to vector<1x128x128xf32>
    %32 = arith.maximumf %30, %31 : vector<1x128x128xf32>
    %33 = math.sqrt %32 : vector<1x128x128xf32>
    %cst_8 = arith.constant dense<0x7F800000> : vector<1x128xf32>
    %34 = vector.multi_reduction <minimumf>, %33, %cst_8 [2] : vector<1x128x128xf32> to vector<1x128xf32>
    %35 = vector.shape_cast %34 : vector<1x128xf32> to vector<1x128x1xf32>
    %36 = vector.broadcast %35 : vector<1x128x1xf32> to vector<1x128x128xf32>
    %37 = arith.subf %33, %36 : vector<1x128x128xf32>
    %cst_9 = arith.constant -1.000000e+01 : f32
    %38 = vector.broadcast %cst_9 : f32 to vector<1x128x128xf32>
    %39 = arith.mulf %37, %38 : vector<1x128x128xf32>
    %40 = math.exp %39 : vector<1x128x128xf32>
    %41 = arith.truncf %40 : vector<1x128x128xf32> to vector<1x128x128xbf16>
    %cst_10 = arith.constant 1.000000e+00 : f32
    %42 = vector.broadcast %cst_10 : f32 to vector<1x128x1xf32>
    %cst_11 = arith.constant 1.000000e+00 : f32
    %43 = vector.broadcast %cst_11 : f32 to vector<1x1x128xf32>
    %cst_12 = arith.constant 9.99999968E-21 : f32
    %c0_i32 = arith.constant 0 : i32
    %c50_i32 = arith.constant 50 : i32
    %44 = arith.addi %c0_i32, %c50_i32 : i32
    %c1_i32 = arith.constant 1 : i32
    %45:2 = scf.for %arg4 = %c0_i32 to %44 step %c1_i32 iter_args(%arg5 = %42, %arg6 = %43) -> (vector<1x128x1xf32>, vector<1x1x128xf32>)  : i32 {
      %86 = arith.truncf %arg6 : vector<1x1x128xf32> to vector<1x1x128xbf16>
      %87 = vector.broadcast %86 : vector<1x1x128xbf16> to vector<1x128x128xbf16>
      %88 = arith.mulf %41, %87 : vector<1x128x128xbf16>
      %89 = arith.extf %88 : vector<1x128x128xbf16> to vector<1x128x128xf32>
      %cst_21 = arith.constant dense<0.000000e+00> : vector<1x128xf32>
      %90 = vector.multi_reduction <add>, %89, %cst_21 [2] : vector<1x128x128xf32> to vector<1x128xf32>
      %91 = vector.shape_cast %90 : vector<1x128xf32> to vector<1x128x1xf32>
      %92 = vector.broadcast %cst_12 : f32 to vector<1x128x1xf32>
      %93 = arith.addf %91, %92 : vector<1x128x1xf32>
      %94 = tpu.reciprocal %93 : vector<1x128x1xf32> -> vector<1x128x1xf32>
      %95 = arith.truncf %94 : vector<1x128x1xf32> to vector<1x128x1xbf16>
      %96 = vector.broadcast %95 : vector<1x128x1xbf16> to vector<1x128x128xbf16>
      %97 = arith.mulf %41, %96 : vector<1x128x128xbf16>
      %98 = arith.extf %97 : vector<1x128x128xbf16> to vector<1x128x128xf32>
      %cst_22 = arith.constant dense<0.000000e+00> : vector<1x128xf32>
      %99 = vector.multi_reduction <add>, %98, %cst_22 [1] : vector<1x128x128xf32> to vector<1x128xf32>
      %100 = vector.shape_cast %99 : vector<1x128xf32> to vector<1x1x128xf32>
      %101 = vector.broadcast %cst_12 : f32 to vector<1x1x128xf32>
      %102 = arith.addf %100, %101 : vector<1x1x128xf32>
      %103 = tpu.reciprocal %102 : vector<1x1x128xf32> -> vector<1x1x128xf32>
      scf.yield %94, %103 : vector<1x128x1xf32>, vector<1x1x128xf32>
    }
    %46 = vector.extract_strided_slice %0 {offsets = [0, 0, 0], sizes = [1, 128, 1], strides = [1, 1, 1]} : vector<1x128x3xf32> to vector<1x128x1xf32>
    %47 = vector.extract_strided_slice %1 {offsets = [0, 0, 0], sizes = [1, 1, 128], strides = [1, 1, 1]} : vector<1x3x128xf32> to vector<1x1x128xf32>
    %48 = vector.broadcast %46 : vector<1x128x1xf32> to vector<1x128x128xf32>
    %49 = vector.broadcast %47 : vector<1x1x128xf32> to vector<1x128x128xf32>
    %50 = arith.mulf %48, %49 : vector<1x128x128xf32>
    %51 = vector.extract_strided_slice %0 {offsets = [0, 0, 1], sizes = [1, 128, 1], strides = [1, 1, 1]} : vector<1x128x3xf32> to vector<1x128x1xf32>
    %52 = vector.extract_strided_slice %1 {offsets = [0, 1, 0], sizes = [1, 1, 128], strides = [1, 1, 1]} : vector<1x3x128xf32> to vector<1x1x128xf32>
    %53 = vector.broadcast %51 : vector<1x128x1xf32> to vector<1x128x128xf32>
    %54 = vector.broadcast %52 : vector<1x1x128xf32> to vector<1x128x128xf32>
    %55 = arith.mulf %53, %54 : vector<1x128x128xf32>
    %56 = arith.addf %50, %55 : vector<1x128x128xf32>
    %57 = vector.extract_strided_slice %0 {offsets = [0, 0, 2], sizes = [1, 128, 1], strides = [1, 1, 1]} : vector<1x128x3xf32> to vector<1x128x1xf32>
    %58 = vector.extract_strided_slice %1 {offsets = [0, 2, 0], sizes = [1, 1, 128], strides = [1, 1, 1]} : vector<1x3x128xf32> to vector<1x1x128xf32>
    %59 = vector.broadcast %57 : vector<1x128x1xf32> to vector<1x128x128xf32>
    %60 = vector.broadcast %58 : vector<1x1x128xf32> to vector<1x128x128xf32>
    %61 = arith.mulf %59, %60 : vector<1x128x128xf32>
    %62 = arith.addf %56, %61 : vector<1x128x128xf32>
    %63 = vector.broadcast %4 : vector<1x128x1xf32> to vector<1x128x128xf32>
    %64 = vector.broadcast %7 : vector<1x1x128xf32> to vector<1x128x128xf32>
    %65 = arith.addf %63, %64 : vector<1x128x128xf32>
    %cst_13 = arith.constant 2.000000e+00 : f32
    %66 = vector.broadcast %cst_13 : f32 to vector<1x128x128xf32>
    %67 = arith.mulf %66, %62 : vector<1x128x128xf32>
    %68 = arith.subf %65, %67 : vector<1x128x128xf32>
    %cst_14 = arith.constant 0.000000e+00 : f32
    %69 = vector.broadcast %cst_14 : f32 to vector<1x128x128xf32>
    %70 = arith.maximumf %68, %69 : vector<1x128x128xf32>
    %71 = math.sqrt %70 : vector<1x128x128xf32>
    %72 = arith.extf %41 : vector<1x128x128xbf16> to vector<1x128x128xf32>
    %73 = arith.mulf %72, %71 : vector<1x128x128xf32>
    %74 = vector.broadcast %45#1 : vector<1x1x128xf32> to vector<1x128x128xf32>
    %75 = arith.mulf %73, %74 : vector<1x128x128xf32>
    %cst_15 = arith.constant dense<0.000000e+00> : vector<1x128xf32>
    %76 = vector.multi_reduction <add>, %75, %cst_15 [2] : vector<1x128x128xf32> to vector<1x128xf32>
    %77 = vector.shape_cast %76 : vector<1x128xf32> to vector<1x128x1xf32>
    %78 = arith.mulf %77, %45#0 : vector<1x128x1xf32>
    %cst_16 = arith.constant dense<0.000000e+00> : vector<1x1xf32>
    %79 = vector.multi_reduction <add>, %78, %cst_16 [1] : vector<1x128x1xf32> to vector<1x1xf32>
    %80 = vector.shape_cast %79 : vector<1x1xf32> to vector<1x1x1xf32>
    %81 = vector.shape_cast %80 : vector<1x1x1xf32> to vector<1x1x1xf32>
    %82 = vector.broadcast %81 : vector<1x1x1xf32> to vector<1x1x128xf32>
    %c0_17 = arith.constant 0 : index
    %c0_18 = arith.constant 0 : index
    %c0_19 = arith.constant 0 : index
    %c0_20 = arith.constant 0 : index
    %83 = vector.load %arg3[%c0_17, %c0_18, %c0_19, %c0_20] : memref<1x1x1x128xf32, #tpu.memory_space<vmem>>, vector<1x1x1x128xf32>
    %84 = vector.shape_cast %83 : vector<1x1x1x128xf32> to vector<1x1x128xf32>
    %85 = vector.shape_cast %82 : vector<1x1x128xf32> to vector<1x1x1x128xf32>
    tpu.vector_store %arg3[%c0_17, %c0_18, %c0_19, %c0_20], %85 {strides = array<i32>} : memref<1x1x1x128xf32, #tpu.memory_space<vmem>>, vector<1x1x1x128xf32>,
    return
  }
  func.func @transform_0(%arg0: i32) -> (i32, i32, i32) {
    %c0_i32 = arith.constant 0 : i32
    %c0_i32_0 = arith.constant 0 : i32
    %c0_i32_1 = arith.constant 0 : i32
    return %arg0, %c0_i32, %c0_i32_0 : i32, i32, i32
  }
  func.func @transform_1(%arg0: i32) -> (i32, i32, i32) {
    %c0_i32 = arith.constant 0 : i32
    %c0_i32_0 = arith.constant 0 : i32
    %c0_i32_1 = arith.constant 0 : i32
    return %arg0, %c0_i32, %c0_i32_0 : i32, i32, i32
  }
  func.func @transform_2(%arg0: i32) -> (i32, i32, i32, i32) {
    %c0_i32 = arith.constant 0 : i32
    %c0_i32_0 = arith.constant 0 : i32
    %c0_i32_1 = arith.constant 0 : i32
    %c0_i32_2 = arith.constant 0 : i32
    return %arg0, %c0_i32, %c0_i32_0, %c0_i32_1 : i32, i32, i32, i32
  }
}

</mosaic_0001>

<llo_original>
// kernel: emd_loss.1
$region0: #{emd_loss.1}
  #allocation0 [shape = 'u32[]', space=smem, size = 0x4, offset = 0x4, fixed_abs, tag = 'smem constant byte address 0x4 - core index']
  #allocation1 [shape = 'u32[72,128]{1,0:T(1,128)}', space=vmem, size = 0x9000, scoped, tag = 'internal scratch']
  %s0 = inlined_call_operand.vmem [shape: f32[2,128,3], index: 0, kind: input, shape index: {}]
  %s1 = inlined_call_operand.vmem [shape: f32[2,3,128], index: 1, kind: input, shape index: {}]
  %s2 = inlined_call_operand.vmem [shape: f32[2,1,1,128], index: 2, kind: output, shape index: {}]
  %s3 = sld [smem:[#allocation0]]
  $region48: #{emd_loss.1} parent=0
    _
  %s5 = ssub.s32 1, %s3
  %s6 = scalar_select 0, %s5, %s3
  loop: start=0, step=1, limit=4
  $region2: #{emd_loss.1} parent=0 // loop_pre_header
    _
  $region3: #{emd_loss.1} parent=0 // loop_header
    %s8 = sphi 0, %s12
    %p9 = scmp.ge.s32.totalorder %s8, 4
    %s18 = sphi 0, %s20
    %s21 = sphi 0, %s18
    %s22 = sphi 0, %s21
    %s38 = sphi 0, %s22
    %s44 = sphi 0, %s46
    %s47 = sphi 0, %s44
    %s48 = sphi 0, %s47
    %s64 = sphi 0, %s48
    %s70 = sphi 0, %s72
    %s73 = sphi 0, %s70
    %s74 = sphi 0, %s73
    %s90 = sphi 0, %s74
  $region4: #{emd_loss.1} parent=0 // loop_header_branch
    %11 = sbr.rel (%p9) target = $region8
  $region5: #{emd_loss.1} parent=0 // loop_body
    %s13 = ssub.s32 %s8, 1
    %s14 = ssub.s32 %s8, 2
    %s15 = sadd.s32 %s8, 1
    %s16 = ssub.s32 %s8, %s15
    %p17 = scmp.eq.s32.totalorder %s16, 0
    %s19 = sadd.s32 %s18, 1
    %s20 = scalar_select %p17, %s18, %s19
    %p23 = pneg %p17
    %p24 = scmp.eq.s32.totalorder %s8, 1
    %p25 = por %p23, %p24
    %p26 = scmp.ne.s32.totalorder %s18, %s21
    %p27 = scmp.eq.s32.totalorder %s8, 0
    %p28 = por %p26, %p27
    %p29 = scmp.ne.s32.totalorder %s18, %s21
    %p30 = scmp.eq.s32.totalorder %s13, 1
    %p31 = por %p29, %p30
    %p32 = scmp.ne.s32.totalorder %s21, %s22
    %p33 = scmp.eq.s32.totalorder %s13, 0
    %p34 = por %p32, %p33
    %p35 = scmp.ne.s32.totalorder %s21, %s22
    %p36 = scmp.eq.s32.totalorder %s14, 1
    %p37 = por %p35, %p36
    %p39 = scmp.ne.s32.totalorder %s22, %s38
    %p40 = scmp.eq.s32.totalorder %s14, 0
    %p41 = por %p39, %p40
    %s42 = ssub.s32 %s8, %s15
    %p43 = scmp.eq.s32.totalorder %s42, 0
    %s45 = sadd.s32 %s44, 1
    %s46 = scalar_select %p43, %s44, %s45
    %p49 = pneg %p43
    %p50 = scmp.eq.s32.totalorder %s8, 1
    %p51 = por %p49, %p50
    %p52 = scmp.ne.s32.totalorder %s44, %s47
    %p53 = scmp.eq.s32.totalorder %s8, 0
    %p54 = por %p52, %p53
    %p55 = scmp.ne.s32.totalorder %s44, %s47
    %p56 = scmp.eq.s32.totalorder %s13, 1
    %p57 = por %p55, %p56
    %p58 = scmp.ne.s32.totalorder %s47, %s48
    %p59 = scmp.eq.s32.totalorder %s13, 0
    %p60 = por %p58, %p59
    %p61 = scmp.ne.s32.totalorder %s47, %s48
    %p62 = scmp.eq.s32.totalorder %s14, 1
    %p63 = por %p61, %p62
    %p65 = scmp.ne.s32.totalorder %s48, %s64
    %p66 = scmp.eq.s32.totalorder %s14, 0
    %p67 = por %p65, %p66
    %s68 = ssub.s32 %s8, %s15
    %p69 = scmp.eq.s32.totalorder %s68, 0
    %s71 = sadd.s32 %s70, 1
    %s72 = scalar_select %p69, %s70, %s71
    %p75 = pneg %p69
    %p76 = scmp.eq.s32.totalorder %s8, 1
    %p77 = por %p75, %p76
    %p78 = scmp.ne.s32.totalorder %s70, %s73
    %p79 = scmp.eq.s32.totalorder %s8, 0
    %p80 = por %p78, %p79
    %p81 = scmp.ne.s32.totalorder %s70, %s73
    %p82 = scmp.eq.s32.totalorder %s13, 1
    %p83 = por %p81, %p82
    %p84 = scmp.ne.s32.totalorder %s73, %s74
    %p85 = scmp.eq.s32.totalorder %s13, 0
    %p86 = por %p84, %p85
    %p87 = scmp.ne.s32.totalorder %s73, %s74
    %p88 = scmp.eq.s32.totalorder %s14, 1
    %p89 = por %p87, %p88
    %p91 = scmp.ne.s32.totalorder %s74, %s90
    %p92 = scmp.eq.s32.totalorder %s14, 0
    %p93 = por %p91, %p92
    %p94 = scmp.le.s32.totalorder 1, %s8
    %p95 = scmp.lt.s32.totalorder %s8, 3
    %p96 = pnand %p94, %p95
    %p97 = pneg %p96
    // Predicated region
    $region9: #{emd_loss.1} parent=5 // pred_check
      _
    $region10: #{emd_loss.1} parent=5 // pred_check_branch
      %99 = sbr.rel (%p96) target = $region12
    $region11: #{emd_loss.1} parent=5 // pred_region
      %s100 = ssub.s32 %s8, 1
    $region12: #{emd_loss.1} parent=5 // pred_fallthru
      _
    %p101 = scmp.lt.s32.totalorder %s8, 2
    // Predicated region
    $region13: #{emd_loss.1} parent=5 // pred_check
      %p102 = pneg %p101
    $region14: #{emd_loss.1} parent=5 // pred_check_branch
      %104 = sbr.rel (%p102) target = $region16
    $region15: #{emd_loss.1} parent=5 // pred_region
      // Predicated region
      $region17: #{emd_loss.1} parent=15 // pred_check
        %p105 = pneg %p28
      $region18: #{emd_loss.1} parent=15 // pred_check_branch
        %107 = sbr.rel (%p105) target = $region20
      $region19: #{emd_loss.1} parent=15 // pred_region
        %p108 = scmp.lt.s32.totalorder %s8, 1
        %s109 = scalar_select %p108, %s8, 1
        %s110 = smul.addr %s109, 16
        %s111 = smul.addr %s110, 8
        %s112 = scalar_lea.vmem %s0, %s111
      $region20: #{emd_loss.1} parent=15 // pred_fallthru
        _
      // Predicated region
      $region21: #{emd_loss.1} parent=15 // pred_check
        %p113 = pneg %p54
      $region22: #{emd_loss.1} parent=15 // pred_check_branch
        %115 = sbr.rel (%p113) target = $region24
      $region23: #{emd_loss.1} parent=15 // pred_region
        %p116 = scmp.lt.s32.totalorder %s8, 1
        %s117 = scalar_select %p116, %s8, 1
        %s118 = smul.addr %s117, 4
        %s119 = scalar_lea.vmem %s1, %s118
      $region24: #{emd_loss.1} parent=15 // pred_fallthru
        _
    $region16: #{emd_loss.1} parent=5 // pred_fallthru
      _
    %p120 = scmp.le.s32.totalorder 1, %s8
    %p121 = scmp.lt.s32.totalorder %s8, 3
    %p122 = pnand %p120, %p121
    %p123 = pneg %p122
    // Predicated region
    $region25: #{emd_loss.1} parent=5 // pred_check
      _
    $region26: #{emd_loss.1} parent=5 // pred_check_branch
      %125 = sbr.rel (%p122) target = $region28
    $region27: #{emd_loss.1} parent=5 // pred_region
      %s126 = ssub.s32 %s8, 1
      %p127 = scmp.lt.s32.totalorder %s13, 1
      %s128 = scalar_select %p127, %s13, 1
      %s129 = smul.addr %s128, 16
      %s130 = smul.addr %s129, 8
      %s131 = scalar_lea.vmem %s0, %s130
      %p132 = pneg %p34
      %p133 = pneg %p31
      %p134 = scmp.lt.s32.totalorder %s13, 1
      %s135 = scalar_select %p134, %s13, 1
      %s136 = smul.addr %s135, 4
      %s137 = scalar_lea.vmem %s1, %s136
      %p138 = pneg %p60
      %p139 = pneg %p57
      %p140 = pneg %p86
      %p141 = pneg %p83
      %p142 = scmp.lt.s32.totalorder %s13, 1
      %s143 = scalar_select %p142, %s13, 1
      %s144 = scalar_lea.vmem %s2, %s143
      %p145 = scmp.lt.s32.totalorder %s13, 1
      %s146 = scalar_select %p145, %s13, 1
      %s147 = smul.addr %s146, 16
      %s148 = smul.addr %s147, 8
      %s149 = scalar_lea.vmem %s0, %s148
      %p150 = scmp.lt.s32.totalorder %s13, 1
      %s151 = scalar_select %p150, %s13, 1
      %s152 = smul.addr %s151, 4
      %s153 = scalar_lea.vmem %s1, %s152
      %p154 = scmp.lt.s32.totalorder %s13, 1
      %s155 = scalar_select %p154, %s13, 1
      %s156 = scalar_lea.vmem %s2, %s155
      %v157 = vld [vmem:[%s149] sm:$0xff]
      %v158 = vld [vmem:[%s149 + $0x8] sm:$0xff]
      %v159 = vld [vmem:[%s149 + $0x10] sm:$0xff]
      %v160 = vld [vmem:[%s149 + $0x18] sm:$0xff]
      %v161 = vld [vmem:[%s149 + $0x20] sm:$0xff]
      %v162 = vld [vmem:[%s149 + $0x28] sm:$0xff]
      %v163 = vld [vmem:[%s149 + $0x30] sm:$0xff]
      %v164 = vld [vmem:[%s149 + $0x38] sm:$0xff]
      %v165 = vld [vmem:[%s149 + $0x40] sm:$0xff]
      %v166 = vld [vmem:[%s149 + $0x48] sm:$0xff]
      %v167 = vld [vmem:[%s149 + $0x50] sm:$0xff]
      %v168 = vld [vmem:[%s149 + $0x58] sm:$0xff]
      %v169 = vld [vmem:[%s149 + $0x60] sm:$0xff]
      %v170 = vld [vmem:[%s149 + $0x68] sm:$0xff]
      %v171 = vld [vmem:[%s149 + $0x70] sm:$0xff]
      %v172 = vld [vmem:[%s149 + $0x78] sm:$0xff]
      %v173 = vld [vmem:[%s153] sm:$0x7]
      %v174 = vmul.f32 %v157, %v157
      %v175 = vmul.f32 %v158, %v158
      %v176 = vmul.f32 %v159, %v159
      %v177 = vmul.f32 %v160, %v160
      %v178 = vmul.f32 %v161, %v161
      %v179 = vmul.f32 %v162, %v162
      %v180 = vmul.f32 %v163, %v163
      %v181 = vmul.f32 %v164, %v164
      %v182 = vmul.f32 %v165, %v165
      %v183 = vmul.f32 %v166, %v166
      %v184 = vmul.f32 %v167, %v167
      %v185 = vmul.f32 %v168, %v168
      %v186 = vmul.f32 %v169, %v169
      %v187 = vmul.f32 %v170, %v170
      %v188 = vmul.f32 %v171, %v171
      %v189 = vmul.f32 %v172, %v172
      %vm190 = vcmask 23552
      %v191 = vsel %vm190, %v174, 0.0
      %192 = vadd.xlane.f32.xlu0 %v191
      %v193 = vpop.xlane.xlu0 %192
      %v194 = vsel %vm190, %v175, 0.0
      %195 = vadd.xlane.f32.xlu0 %v194
      %v196 = vpop.xlane.xlu0 %195
      %v197 = vsel %vm190, %v176, 0.0
      %198 = vadd.xlane.f32.xlu0 %v197
      %v199 = vpop.xlane.xlu0 %198
      %v200 = vsel %vm190, %v177, 0.0
      %201 = vadd.xlane.f32.xlu0 %v200
      %v202 = vpop.xlane.xlu0 %201
      %v203 = vsel %vm190, %v178, 0.0
      %204 = vadd.xlane.f32.xlu0 %v203
      %v205 = vpop.xlane.xlu0 %204
      %v206 = vsel %vm190, %v179, 0.0
      %207 = vadd.xlane.f32.xlu0 %v206
      %v208 = vpop.xlane.xlu0 %207
      %v209 = vsel %vm190, %v180, 0.0
      %210 = vadd.xlane.f32.xlu0 %v209
      %v211 = vpop.xlane.xlu0 %210
      %v212 = vsel %vm190, %v181, 0.0
      %213 = vadd.xlane.f32.xlu0 %v212
      %v214 = vpop.xlane.xlu0 %213
      %v215 = vsel %vm190, %v182, 0.0
      %216 = vadd.xlane.f32.xlu0 %v215
      %v217 = vpop.xlane.xlu0 %216
      %v218 = vsel %vm190, %v183, 0.0
      %219 = vadd.xlane.f32.xlu0 %v218
      %v220 = vpop.xlane.xlu0 %219
      %v221 = vsel %vm190, %v184, 0.0
      %222 = vadd.xlane.f32.xlu0 %v221
      %v223 = vpop.xlane.xlu0 %222
      %v224 = vsel %vm190, %v185, 0.0
      %225 = vadd.xlane.f32.xlu0 %v224
      %v226 = vpop.xlane.xlu0 %225
      %v227 = vsel %vm190, %v186, 0.0
      %228 = vadd.xlane.f32.xlu0 %v227
      %v229 = vpop.xlane.xlu0 %228
      %v230 = vsel %vm190, %v187, 0.0
      %231 = vadd.xlane.f32.xlu0 %v230
      %v232 = vpop.xlane.xlu0 %231
      %v233 = vsel %vm190, %v188, 0.0
      %234 = vadd.xlane.f32.xlu0 %v233
      %v235 = vpop.xlane.xlu0 %234
      %v236 = vsel %vm190, %v189, 0.0
      %237 = vadd.xlane.f32.xlu0 %v236
      %v238 = vpop.xlane.xlu0 %237
      %v239 = vmul.f32 %v173, %v173
      %vm240 = vcmask 1042432
      %v241 = vsel %vm240, %v239, 0.0
      %v242 = vrot.slane %v241, 4
      %v243 = vadd.f32 %v241, %v242
      %v244 = vrot.slane %v243, 2
      %v245 = vadd.f32 %v243, %v244
      %v246 = vrot.slane %v245, 1
      %v247 = vadd.f32 %v245, %v246
      %249 = vset.pattern.permute.xlu0 0
      %250 = vperm.xlu0 %249, %v157
      %v251 = vpop.permute.xlu0 %250
      %254 = vset.pattern.permute.xlu0 0
      %255 = vperm.xlu0 %254, %v158
      %v256 = vpop.permute.xlu0 %255
      %259 = vset.pattern.permute.xlu0 0
      %260 = vperm.xlu0 %259, %v159
      %v261 = vpop.permute.xlu0 %260
      %264 = vset.pattern.permute.xlu0 0
      %265 = vperm.xlu0 %264, %v160
      %v266 = vpop.permute.xlu0 %265
      %269 = vset.pattern.permute.xlu0 0
      %270 = vperm.xlu0 %269, %v161
      %v271 = vpop.permute.xlu0 %270
      %274 = vset.pattern.permute.xlu0 0
      %275 = vperm.xlu0 %274, %v162
      %v276 = vpop.permute.xlu0 %275
      %279 = vset.pattern.permute.xlu0 0
      %280 = vperm.xlu0 %279, %v163
      %v281 = vpop.permute.xlu0 %280
      %284 = vset.pattern.permute.xlu0 0
      %285 = vperm.xlu0 %284, %v164
      %v286 = vpop.permute.xlu0 %285
      %289 = vset.pattern.permute.xlu0 0
      %290 = vperm.xlu0 %289, %v165
      %v291 = vpop.permute.xlu0 %290
      %294 = vset.pattern.permute.xlu0 0
      %295 = vperm.xlu0 %294, %v166
      %v296 = vpop.permute.xlu0 %295
      %299 = vset.pattern.permute.xlu0 0
      %300 = vperm.xlu0 %299, %v167
      %v301 = vpop.permute.xlu0 %300
      %304 = vset.pattern.permute.xlu0 0
      %305 = vperm.xlu0 %304, %v168
      %v306 = vpop.permute.xlu0 %305
      %309 = vset.pattern.permute.xlu0 0
      %310 = vperm.xlu0 %309, %v169
      %v311 = vpop.permute.xlu0 %310
      %314 = vset.pattern.permute.xlu0 0
      %315 = vperm.xlu0 %314, %v170
      %v316 = vpop.permute.xlu0 %315
      %319 = vset.pattern.permute.xlu0 0
      %320 = vperm.xlu0 %319, %v171
      %v321 = vpop.permute.xlu0 %320
      %324 = vset.pattern.permute.xlu0 0
      %325 = vperm.xlu0 %324, %v172
      %v326 = vpop.permute.xlu0 %325
      %v328 = vperm.slane %v173, 0
      %v329 = vmul.f32 %v251, %v328
      %v330 = vmul.f32 %v256, %v328
      %v331 = vmul.f32 %v261, %v328
      %v332 = vmul.f32 %v266, %v328
      %v333 = vmul.f32 %v271, %v328
      %v334 = vmul.f32 %v276, %v328
      %v335 = vmul.f32 %v281, %v328
      %v336 = vmul.f32 %v286, %v328
      %v337 = vmul.f32 %v291, %v328
      %v338 = vmul.f32 %v296, %v328
      %v339 = vmul.f32 %v301, %v328
      %v340 = vmul.f32 %v306, %v328
      %v341 = vmul.f32 %v311, %v328
      %v342 = vmul.f32 %v316, %v328
      %v343 = vmul.f32 %v321, %v328
      %v344 = vmul.f32 %v326, %v328
      %345 = vset.pattern.permute.xlu0 1
      %346 = vperm.xlu0 %345, %v157
      %v347 = vpop.permute.xlu0 %346
      %349 = vset.pattern.permute.xlu0 1
      %350 = vperm.xlu0 %349, %v158
      %v351 = vpop.permute.xlu0 %350
      %353 = vset.pattern.permute.xlu0 1
      %354 = vperm.xlu0 %353, %v159
      %v355 = vpop.permute.xlu0 %354
      %357 = vset.pattern.permute.xlu0 1
      %358 = vperm.xlu0 %357, %v160
      %v359 = vpop.permute.xlu0 %358
      %361 = vset.pattern.permute.xlu0 1
      %362 = vperm.xlu0 %361, %v161
      %v363 = vpop.permute.xlu0 %362
      %365 = vset.pattern.permute.xlu0 1
      %366 = vperm.xlu0 %365, %v162
      %v367 = vpop.permute.xlu0 %366
      %369 = vset.pattern.permute.xlu0 1
      %370 = vperm.xlu0 %369, %v163
      %v371 = vpop.permute.xlu0 %370
      %373 = vset.pattern.permute.xlu0 1
      %374 = vperm.xlu0 %373, %v164
      %v375 = vpop.permute.xlu0 %374
      %377 = vset.pattern.permute.xlu0 1
      %378 = vperm.xlu0 %377, %v165
      %v379 = vpop.permute.xlu0 %378
      %381 = vset.pattern.permute.xlu0 1
      %382 = vperm.xlu0 %381, %v166
      %v383 = vpop.permute.xlu0 %382
      %385 = vset.pattern.permute.xlu0 1
      %386 = vperm.xlu0 %385, %v167
      %v387 = vpop.permute.xlu0 %386
      %389 = vset.pattern.permute.xlu0 1
      %390 = vperm.xlu0 %389, %v168
      %v391 = vpop.permute.xlu0 %390
      %393 = vset.pattern.permute.xlu0 1
      %394 = vperm.xlu0 %393, %v169
      %v395 = vpop.permute.xlu0 %394
      %397 = vset.pattern.permute.xlu0 1
      %398 = vperm.xlu0 %397, %v170
      %v399 = vpop.permute.xlu0 %398
      %401 = vset.pattern.permute.xlu0 1
      %402 = vperm.xlu0 %401, %v171
      %v403 = vpop.permute.xlu0 %402
      %405 = vset.pattern.permute.xlu0 1
      %406 = vperm.xlu0 %405, %v172
      %v407 = vpop.permute.xlu0 %406
      %v409 = vperm.slane %v173, 1
      %v410 = vmul.f32 %v347, %v409
      %v411 = vmul.f32 %v351, %v409
      %v412 = vmul.f32 %v355, %v409
      %v413 = vmul.f32 %v359, %v409
      %v414 = vmul.f32 %v363, %v409
      %v415 = vmul.f32 %v367, %v409
      %v416 = vmul.f32 %v371, %v409
      %v417 = vmul.f32 %v375, %v409
      %v418 = vmul.f32 %v379, %v409
      %v419 = vmul.f32 %v383, %v409
      %v420 = vmul.f32 %v387, %v409
      %v421 = vmul.f32 %v391, %v409
      %v422 = vmul.f32 %v395, %v409
      %v423 = vmul.f32 %v399, %v409
      %v424 = vmul.f32 %v403, %v409
      %v425 = vmul.f32 %v407, %v409
      %v426 = vadd.f32 %v329, %v410
      %v427 = vadd.f32 %v330, %v411
      %v428 = vadd.f32 %v331, %v412
      %v429 = vadd.f32 %v332, %v413
      %v430 = vadd.f32 %v333, %v414
      %v431 = vadd.f32 %v334, %v415
      %v432 = vadd.f32 %v335, %v416
      %v433 = vadd.f32 %v336, %v417
      %v434 = vadd.f32 %v337, %v418
      %v435 = vadd.f32 %v338, %v419
      %v436 = vadd.f32 %v339, %v420
      %v437 = vadd.f32 %v340, %v421
      %v438 = vadd.f32 %v341, %v422
      %v439 = vadd.f32 %v342, %v423
      %v440 = vadd.f32 %v343, %v424
      %v441 = vadd.f32 %v344, %v425
      %442 = vset.pattern.permute.xlu0 2
      %443 = vperm.xlu0 %442, %v157
      %v444 = vpop.permute.xlu0 %443
      %446 = vset.pattern.permute.xlu0 2
      %447 = vperm.xlu0 %446, %v158
      %v448 = vpop.permute.xlu0 %447
      %450 = vset.pattern.permute.xlu0 2
      %451 = vperm.xlu0 %450, %v159
      %v452 = vpop.permute.xlu0 %451
      %454 = vset.pattern.permute.xlu0 2
      %455 = vperm.xlu0 %454, %v160
      %v456 = vpop.permute.xlu0 %455
      %458 = vset.pattern.permute.xlu0 2
      %459 = vperm.xlu0 %458, %v161
      %v460 = vpop.permute.xlu0 %459
      %462 = vset.pattern.permute.xlu0 2
      %463 = vperm.xlu0 %462, %v162
      %v464 = vpop.permute.xlu0 %463
      %466 = vset.pattern.permute.xlu0 2
      %467 = vperm.xlu0 %466, %v163
      %v468 = vpop.permute.xlu0 %467
      %470 = vset.pattern.permute.xlu0 2
      %471 = vperm.xlu0 %470, %v164
      %v472 = vpop.permute.xlu0 %471
      %474 = vset.pattern.permute.xlu0 2
      %475 = vperm.xlu0 %474, %v165
      %v476 = vpop.permute.xlu0 %475
      %478 = vset.pattern.permute.xlu0 2
      %479 = vperm.xlu0 %478, %v166
      %v480 = vpop.permute.xlu0 %479
      %482 = vset.pattern.permute.xlu0 2
      %483 = vperm.xlu0 %482, %v167
      %v484 = vpop.permute.xlu0 %483
      %486 = vset.pattern.permute.xlu0 2
      %487 = vperm.xlu0 %486, %v168
      %v488 = vpop.permute.xlu0 %487
      %490 = vset.pattern.permute.xlu0 2
      %491 = vperm.xlu0 %490, %v169
      %v492 = vpop.permute.xlu0 %491
      %494 = vset.pattern.permute.xlu0 2
      %495 = vperm.xlu0 %494, %v170
      %v496 = vpop.permute.xlu0 %495
      %498 = vset.pattern.permute.xlu0 2
      %499 = vperm.xlu0 %498, %v171
      %v500 = vpop.permute.xlu0 %499
      %502 = vset.pattern.permute.xlu0 2
      %503 = vperm.xlu0 %502, %v172
      %v504 = vpop.permute.xlu0 %503
      %v506 = vperm.slane %v173, 2
      %v507 = vmul.f32 %v444, %v506
      %v508 = vmul.f32 %v448, %v506
      %v509 = vmul.f32 %v452, %v506
      %v510 = vmul.f32 %v456, %v506
      %v511 = vmul.f32 %v460, %v506
      %v512 = vmul.f32 %v464, %v506
      %v513 = vmul.f32 %v468, %v506
      %v514 = vmul.f32 %v472, %v506
      %v515 = vmul.f32 %v476, %v506
      %v516 = vmul.f32 %v480, %v506
      %v517 = vmul.f32 %v484, %v506
      %v518 = vmul.f32 %v488, %v506
      %v519 = vmul.f32 %v492, %v506
      %v520 = vmul.f32 %v496, %v506
      %v521 = vmul.f32 %v500, %v506
      %v522 = vmul.f32 %v504, %v506
      %v523 = vadd.f32 %v426, %v507
      %v524 = vadd.f32 %v427, %v508
      %v525 = vadd.f32 %v428, %v509
      %v526 = vadd.f32 %v429, %v510
      %v527 = vadd.f32 %v430, %v511
      %v528 = vadd.f32 %v431, %v512
      %v529 = vadd.f32 %v432, %v513
      %v530 = vadd.f32 %v433, %v514
      %v531 = vadd.f32 %v434, %v515
      %v532 = vadd.f32 %v435, %v516
      %v533 = vadd.f32 %v436, %v517
      %v534 = vadd.f32 %v437, %v518
      %v535 = vadd.f32 %v438, %v519
      %v536 = vadd.f32 %v439, %v520
      %v537 = vadd.f32 %v440, %v521
      %v538 = vadd.f32 %v441, %v522
      %v539 = vadd.f32 %v193, %v247
      %v540 = vadd.f32 %v196, %v247
      %v541 = vadd.f32 %v199, %v247
      %v542 = vadd.f32 %v202, %v247
      %v543 = vadd.f32 %v205, %v247
      %v544 = vadd.f32 %v208, %v247
      %v545 = vadd.f32 %v211, %v247
      %v546 = vadd.f32 %v214, %v247
      %v547 = vadd.f32 %v217, %v247
      %v548 = vadd.f32 %v220, %v247
      %v549 = vadd.f32 %v223, %v247
      %v550 = vadd.f32 %v226, %v247
      %v551 = vadd.f32 %v229, %v247
      %v552 = vadd.f32 %v232, %v247
      %v553 = vadd.f32 %v235, %v247
      %v554 = vadd.f32 %v238, %v247
      %v555 = vmul.f32 %v523, 2.0
      %v556 = vmul.f32 %v524, 2.0
      %v557 = vmul.f32 %v525, 2.0
      %v558 = vmul.f32 %v526, 2.0
      %v559 = vmul.f32 %v527, 2.0
      %v560 = vmul.f32 %v528, 2.0
      %v561 = vmul.f32 %v529, 2.0
      %v562 = vmul.f32 %v530, 2.0
      %v563 = vmul.f32 %v531, 2.0
      %v564 = vmul.f32 %v532, 2.0
      %v565 = vmul.f32 %v533, 2.0
      %v566 = vmul.f32 %v534, 2.0
      %v567 = vmul.f32 %v535, 2.0
      %v568 = vmul.f32 %v536, 2.0
      %v569 = vmul.f32 %v537, 2.0
      %v570 = vmul.f32 %v538, 2.0
      %v571 = vsub.f32 %v539, %v555
      %v572 = vsub.f32 %v540, %v556
      %v573 = vsub.f32 %v541, %v557
      %v574 = vsub.f32 %v542, %v558
      %v575 = vsub.f32 %v543, %v559
      %v576 = vsub.f32 %v544, %v560
      %v577 = vsub.f32 %v545, %v561
      %v578 = vsub.f32 %v546, %v562
      %v579 = vsub.f32 %v547, %v563
      %v580 = vsub.f32 %v548, %v564
      %v581 = vsub.f32 %v549, %v565
      %v582 = vsub.f32 %v550, %v566
      %v583 = vsub.f32 %v551, %v567
      %v584 = vsub.f32 %v552, %v568
      %v585 = vsub.f32 %v553, %v569
      %v586 = vsub.f32 %v554, %v570
      %v587 = vmax.f32 %v571, 0.0
      %v588 = vmax.f32 %v572, 0.0
      %v589 = vmax.f32 %v573, 0.0
      %v590 = vmax.f32 %v574, 0.0
      %v591 = vmax.f32 %v575, 0.0
      %v592 = vmax.f32 %v576, 0.0
      %v593 = vmax.f32 %v577, 0.0
      %v594 = vmax.f32 %v578, 0.0
      %v595 = vmax.f32 %v579, 0.0
      %v596 = vmax.f32 %v580, 0.0
      %v597 = vmax.f32 %v581, 0.0
      %v598 = vmax.f32 %v582, 0.0
      %v599 = vmax.f32 %v583, 0.0
      %v600 = vmax.f32 %v584, 0.0
      %v601 = vmax.f32 %v585, 0.0
      %v602 = vmax.f32 %v586, 0.0
      %v603 = vrsqrt.pop %v587
      %v604 = vmul.f32 %v603, %v587
      %v605 = vmul.f32 %v604, %v603
      %v606 = vmul.f32 0.5, %v605
      %v607 = vsub.f32 1.5, %v606
      %v608 = vmul.f32 %v603, %v607
      %v609 = vmul.f32 %v587, %v608
      %vm610 = vcmp.eq.f32.partialorder %v587, inf
      %v611 = vsel %vm610, %v587, %v609
      %vm612 = vcmp.eq.f32.partialorder %v587, 0.0
      %v613 = vand.u32 %v587, 2147483648
      %v614 = vsel %vm612, %v613, %v611
      %v615 = vrsqrt.pop %v588
      %v616 = vmul.f32 %v615, %v588
      %v617 = vmul.f32 %v616, %v615
      %v618 = vmul.f32 0.5, %v617
      %v619 = vsub.f32 1.5, %v618
      %v620 = vmul.f32 %v615, %v619
      %v621 = vmul.f32 %v588, %v620
      %vm622 = vcmp.eq.f32.partialorder %v588, inf
      %v623 = vsel %vm622, %v588, %v621
      %vm624 = vcmp.eq.f32.partialorder %v588, 0.0
      %v625 = vand.u32 %v588, 2147483648
      %v626 = vsel %vm624, %v625, %v623
      %v627 = vrsqrt.pop %v589
      %v628 = vmul.f32 %v627, %v589
      %v629 = vmul.f32 %v628, %v627
      %v630 = vmul.f32 0.5, %v629
      %v631 = vsub.f32 1.5, %v630
      %v632 = vmul.f32 %v627, %v631
      %v633 = vmul.f32 %v589, %v632
      %vm634 = vcmp.eq.f32.partialorder %v589, inf
      %v635 = vsel %vm634, %v589, %v633
      %vm636 = vcmp.eq.f32.partialorder %v589, 0.0
      %v637 = vand.u32 %v589, 2147483648
      %v638 = vsel %vm636, %v637, %v635
      %v639 = vrsqrt.pop %v590
      %v640 = vmul.f32 %v639, %v590
      %v641 = vmul.f32 %v640, %v639
      %v642 = vmul.f32 0.5, %v641
      %v643 = vsub.f32 1.5, %v642
      %v644 = vmul.f32 %v639, %v643
      %v645 = vmul.f32 %v590, %v644
      %vm646 = vcmp.eq.f32.partialorder %v590, inf
      %v647 = vsel %vm646, %v590, %v645
      %vm648 = vcmp.eq.f32.partialorder %v590, 0.0
      %v649 = vand.u32 %v590, 2147483648
      %v650 = vsel %vm648, %v649, %v647
      %v651 = vrsqrt.pop %v591
      %v652 = vmul.f32 %v651, %v591
      %v653 = vmul.f32 %v652, %v651
      %v654 = vmul.f32 0.5, %v653
      %v655 = vsub.f32 1.5, %v654
      %v656 = vmul.f32 %v651, %v655
      %v657 = vmul.f32 %v591, %v656
      %vm658 = vcmp.eq.f32.partialorder %v591, inf
      %v659 = vsel %vm658, %v591, %v657
      %vm660 = vcmp.eq.f32.partialorder %v591, 0.0
      %v661 = vand.u32 %v591, 2147483648
      %v662 = vsel %vm660, %v661, %v659
      %v663 = vrsqrt.pop %v592
      %v664 = vmul.f32 %v663, %v592
      %v665 = vmul.f32 %v664, %v663
      %v666 = vmul.f32 0.5, %v665
      %v667 = vsub.f32 1.5, %v666
      %v668 = vmul.f32 %v663, %v667
      %v669 = vmul.f32 %v592, %v668
      %vm670 = vcmp.eq.f32.partialorder %v592, inf
      %v671 = vsel %vm670, %v592, %v669
      %vm672 = vcmp.eq.f32.partialorder %v592, 0.0
      %v673 = vand.u32 %v592, 2147483648
      %v674 = vsel %vm672, %v673, %v671
      %v675 = vrsqrt.pop %v593
      %v676 = vmul.f32 %v675, %v593
      %v677 = vmul.f32 %v676, %v675
      %v678 = vmul.f32 0.5, %v677
      %v679 = vsub.f32 1.5, %v678
      %v680 = vmul.f32 %v675, %v679
      %v681 = vmul.f32 %v593, %v680
      %vm682 = vcmp.eq.f32.partialorder %v593, inf
      %v683 = vsel %vm682, %v593, %v681
      %vm684 = vcmp.eq.f32.partialorder %v593, 0.0
      %v685 = vand.u32 %v593, 2147483648
      %v686 = vsel %vm684, %v685, %v683
      %v687 = vrsqrt.pop %v594
      %v688 = vmul.f32 %v687, %v594
      %v689 = vmul.f32 %v688, %v687
      %v690 = vmul.f32 0.5, %v689
      %v691 = vsub.f32 1.5, %v690
      %v692 = vmul.f32 %v687, %v691
      %v693 = vmul.f32 %v594, %v692
      %vm694 = vcmp.eq.f32.partialorder %v594, inf
      %v695 = vsel %vm694, %v594, %v693
      %vm696 = vcmp.eq.f32.partialorder %v594, 0.0
      %v697 = vand.u32 %v594, 2147483648
      %v698 = vsel %vm696, %v697, %v695
      %v699 = vrsqrt.pop %v595
      %v700 = vmul.f32 %v699, %v595
      %v701 = vmul.f32 %v700, %v699
      %v702 = vmul.f32 0.5, %v701
      %v703 = vsub.f32 1.5, %v702
      %v704 = vmul.f32 %v699, %v703
      %v705 = vmul.f32 %v595, %v704
      %vm706 = vcmp.eq.f32.partialorder %v595, inf
      %v707 = vsel %vm706, %v595, %v705
      %vm708 = vcmp.eq.f32.partialorder %v595, 0.0
      %v709 = vand.u32 %v595, 2147483648
      %v710 = vsel %vm708, %v709, %v707
      %v711 = vrsqrt.pop %v596
      %v712 = vmul.f32 %v711, %v596
      %v713 = vmul.f32 %v712, %v711
      %v714 = vmul.f32 0.5, %v713
      %v715 = vsub.f32 1.5, %v714
      %v716 = vmul.f32 %v711, %v715
      %v717 = vmul.f32 %v596, %v716
      %vm718 = vcmp.eq.f32.partialorder %v596, inf
      %v719 = vsel %vm718, %v596, %v717
      %vm720 = vcmp.eq.f32.partialorder %v596, 0.0
      %v721 = vand.u32 %v596, 2147483648
      %v722 = vsel %vm720, %v721, %v719
      %v723 = vrsqrt.pop %v597
      %v724 = vmul.f32 %v723, %v597
      %v725 = vmul.f32 %v724, %v723
      %v726 = vmul.f32 0.5, %v725
      %v727 = vsub.f32 1.5, %v726
      %v728 = vmul.f32 %v723, %v727
      %v729 = vmul.f32 %v597, %v728
      %vm730 = vcmp.eq.f32.partialorder %v597, inf
      %v731 = vsel %vm730, %v597, %v729
      %vm732 = vcmp.eq.f32.partialorder %v597, 0.0
      %v733 = vand.u32 %v597, 2147483648
      %v734 = vsel %vm732, %v733, %v731
      %v735 = vrsqrt.pop %v598
      %v736 = vmul.f32 %v735, %v598
      %v737 = vmul.f32 %v736, %v735
      %v738 = vmul.f32 0.5, %v737
      %v739 = vsub.f32 1.5, %v738
      %v740 = vmul.f32 %v735, %v739
      %v741 = vmul.f32 %v598, %v740
      %vm742 = vcmp.eq.f32.partialorder %v598, inf
      %v743 = vsel %vm742, %v598, %v741
      %vm744 = vcmp.eq.f32.partialorder %v598, 0.0
      %v745 = vand.u32 %v598, 2147483648
      %v746 = vsel %vm744, %v745, %v743
      %v747 = vrsqrt.pop %v599
      %v748 = vmul.f32 %v747, %v599
      %v749 = vmul.f32 %v748, %v747
      %v750 = vmul.f32 0.5, %v749
      %v751 = vsub.f32 1.5, %v750
      %v752 = vmul.f32 %v747, %v751
      %v753 = vmul.f32 %v599, %v752
      %vm754 = vcmp.eq.f32.partialorder %v599, inf
      %v755 = vsel %vm754, %v599, %v753
      %vm756 = vcmp.eq.f32.partialorder %v599, 0.0
      %v757 = vand.u32 %v599, 2147483648
      %v758 = vsel %vm756, %v757, %v755
      %v759 = vrsqrt.pop %v600
      %v760 = vmul.f32 %v759, %v600
      %v761 = vmul.f32 %v760, %v759
      %v762 = vmul.f32 0.5, %v761
      %v763 = vsub.f32 1.5, %v762
      %v764 = vmul.f32 %v759, %v763
      %v765 = vmul.f32 %v600, %v764
      %vm766 = vcmp.eq.f32.partialorder %v600, inf
      %v767 = vsel %vm766, %v600, %v765
      %vm768 = vcmp.eq.f32.partialorder %v600, 0.0
      %v769 = vand.u32 %v600, 2147483648
      %v770 = vsel %vm768, %v769, %v767
      %v771 = vrsqrt.pop %v601
      %v772 = vmul.f32 %v771, %v601
      %v773 = vmul.f32 %v772, %v771
      %v774 = vmul.f32 0.5, %v773
      %v775 = vsub.f32 1.5, %v774
      %v776 = vmul.f32 %v771, %v775
      %v777 = vmul.f32 %v601, %v776
      %vm778 = vcmp.eq.f32.partialorder %v601, inf
      %v779 = vsel %vm778, %v601, %v777
      %vm780 = vcmp.eq.f32.partialorder %v601, 0.0
      %v781 = vand.u32 %v601, 2147483648
      %v782 = vsel %vm780, %v781, %v779
      %v783 = vrsqrt.pop %v602
      %v784 = vmul.f32 %v783, %v602
      %v785 = vmul.f32 %v784, %v783
      %v786 = vmul.f32 0.5, %v785
      %v787 = vsub.f32 1.5, %v786
      %v788 = vmul.f32 %v783, %v787
      %v789 = vmul.f32 %v602, %v788
      %vm790 = vcmp.eq.f32.partialorder %v602, inf
      %v791 = vsel %vm790, %v602, %v789
      %vm792 = vcmp.eq.f32.partialorder %v602, 0.0
      %v793 = vand.u32 %v602, 2147483648
      %v794 = vsel %vm792, %v793, %v791
      %795 = vmin.xlane.f32.xlu0 %v614
      %v796 = vpop.xlane.xlu0 %795
      %797 = vmin.xlane.f32.xlu0 %v626
      %v798 = vpop.xlane.xlu0 %797
      %799 = vmin.xlane.f32.xlu0 %v638
      %v800 = vpop.xlane.xlu0 %799
      %801 = vmin.xlane.f32.xlu0 %v650
      %v802 = vpop.xlane.xlu0 %801
      %803 = vmin.xlane.f32.xlu0 %v662
      %v804 = vpop.xlane.xlu0 %803
      %805 = vmin.xlane.f32.xlu0 %v674
      %v806 = vpop.xlane.xlu0 %805
      %807 = vmin.xlane.f32.xlu0 %v686
      %v808 = vpop.xlane.xlu0 %807
      %809 = vmin.xlane.f32.xlu0 %v698
      %v810 = vpop.xlane.xlu0 %809
      %811 = vmin.xlane.f32.xlu0 %v710
      %v812 = vpop.xlane.xlu0 %811
      %813 = vmin.xlane.f32.xlu0 %v722
      %v814 = vpop.xlane.xlu0 %813
      %815 = vmin.xlane.f32.xlu0 %v734
      %v816 = vpop.xlane.xlu0 %815
      %817 = vmin.xlane.f32.xlu0 %v746
      %v818 = vpop.xlane.xlu0 %817
      %819 = vmin.xlane.f32.xlu0 %v758
      %v820 = vpop.xlane.xlu0 %819
      %821 = vmin.xlane.f32.xlu0 %v770
      %v822 = vpop.xlane.xlu0 %821
      %823 = vmin.xlane.f32.xlu0 %v782
      %v824 = vpop.xlane.xlu0 %823
      %825 = vmin.xlane.f32.xlu0 %v794
      %v826 = vpop.xlane.xlu0 %825
      %v827 = vsub.f32 %v614, %v796
      %v828 = vsub.f32 %v626, %v798
      %v829 = vsub.f32 %v638, %v800
      %v830 = vsub.f32 %v650, %v802
      %v831 = vsub.f32 %v662, %v804
      %v832 = vsub.f32 %v674, %v806
      %v833 = vsub.f32 %v686, %v808
      %v834 = vsub.f32 %v698, %v810
      %v835 = vsub.f32 %v710, %v812
      %v836 = vsub.f32 %v722, %v814
      %v837 = vsub.f32 %v734, %v816
      %v838 = vsub.f32 %v746, %v818
      %v839 = vsub.f32 %v758, %v820
      %v840 = vsub.f32 %v770, %v822
      %v841 = vsub.f32 %v782, %v824
      %v842 = vsub.f32 %v794, %v826
      %v843 = vmul.f32 %v827, -10.0
      %v844 = vmul.f32 %v828, -10.0
      %v845 = vmul.f32 %v829, -10.0
      %v846 = vmul.f32 %v830, -10.0
      %v847 = vmul.f32 %v831, -10.0
      %v848 = vmul.f32 %v832, -10.0
      %v849 = vmul.f32 %v833, -10.0
      %v850 = vmul.f32 %v834, -10.0
      %v851 = vmul.f32 %v835, -10.0
      %v852 = vmul.f32 %v836, -10.0
      %v853 = vmul.f32 %v837, -10.0
      %v854 = vmul.f32 %v838, -10.0
      %v855 = vmul.f32 %v839, -10.0
      %v856 = vmul.f32 %v840, -10.0
      %v857 = vmul.f32 %v841, -10.0
      %v858 = vmul.f32 %v842, -10.0
      %v859 = vmul.f32 %v843, 1.442695
      %v860 = vpow.pop %v859
      %v861 = vmul.f32 %v844, 1.442695
      %v862 = vpow.pop %v861
      %v863 = vmul.f32 %v845, 1.442695
      %v864 = vpow.pop %v863
      %v865 = vmul.f32 %v846, 1.442695
      %v866 = vpow.pop %v865
      %v867 = vmul.f32 %v847, 1.442695
      %v868 = vpow.pop %v867
      %v869 = vmul.f32 %v848, 1.442695
      %v870 = vpow.pop %v869
      %v871 = vmul.f32 %v849, 1.442695
      %v872 = vpow.pop %v871
      %v873 = vmul.f32 %v850, 1.442695
      %v874 = vpow.pop %v873
      %v875 = vmul.f32 %v851, 1.442695
      %v876 = vpow.pop %v875
      %v877 = vmul.f32 %v852, 1.442695
      %v878 = vpow.pop %v877
      %v879 = vmul.f32 %v853, 1.442695
      %v880 = vpow.pop %v879
      %v881 = vmul.f32 %v854, 1.442695
      %v882 = vpow.pop %v881
      %v883 = vmul.f32 %v855, 1.442695
      %v884 = vpow.pop %v883
      %v885 = vmul.f32 %v856, 1.442695
      %v886 = vpow.pop %v885
      %v887 = vmul.f32 %v857, 1.442695
      %v888 = vpow.pop %v887
      %v889 = vmul.f32 %v858, 1.442695
      %v890 = vpow.pop %v889
      %v891 = vpack.c.bf16 %v860, %v860
      %v892 = vpack.c.bf16 %v862, %v862
      %v893 = vpack.c.bf16 %v864, %v864
      %v894 = vpack.c.bf16 %v866, %v866
      %v895 = vpack.c.bf16 %v868, %v868
      %v896 = vpack.c.bf16 %v870, %v870
      %v897 = vpack.c.bf16 %v872, %v872
      %v898 = vpack.c.bf16 %v874, %v874
      %v899 = vpack.c.bf16 %v876, %v876
      %v900 = vpack.c.bf16 %v878, %v878
      %v901 = vpack.c.bf16 %v880, %v880
      %v902 = vpack.c.bf16 %v882, %v882
      %v903 = vpack.c.bf16 %v884, %v884
      %v904 = vpack.c.bf16 %v886, %v886
      %v905 = vpack.c.bf16 %v888, %v888
      %v906 = vpack.c.bf16 %v890, %v890
      loop: start=0, step=1, limit=50
      $region29: #{emd_loss.1} parent=27 // loop_pre_header
        _
      $region30: #{emd_loss.1} parent=27 // loop_header
        %s908 = sphi 0, %s912
        %p909 = scmp.ge.s32.totalorder %s908, 50
        %v913 = vphi 1.0, %v1049
        %v914 = vphi 1.0, %v1063
        %v915 = vphi 1.0, %v1077
        %v916 = vphi 1.0, %v1091
        %v917 = vphi 1.0, %v1105
        %v918 = vphi 1.0, %v1119
        %v919 = vphi 1.0, %v1133
        %v920 = vphi 1.0, %v1147
        %v921 = vphi 1.0, %v1161
        %v922 = vphi 1.0, %v1175
        %v923 = vphi 1.0, %v1189
        %v924 = vphi 1.0, %v1203
        %v925 = vphi 1.0, %v1217
        %v926 = vphi 1.0, %v1231
        %v927 = vphi 1.0, %v1245
        %v928 = vphi 1.0, %v1259
        %v929 = vphi 1.0, %v1367
      $region31: #{emd_loss.1} parent=27 // loop_header_branch
        %911 = sbr.rel (%p909) target = $region35
      $region32: #{emd_loss.1} parent=27 // loop_body
        %v930 = vpack.c.bf16 %v929, %v929
        %v931 = vunpack.c.l.bf16 %v891
        %v932 = vunpack.c.l.bf16 %v892
        %v933 = vunpack.c.l.bf16 %v893
        %v934 = vunpack.c.l.bf16 %v894
        %v935 = vunpack.c.l.bf16 %v895
        %v936 = vunpack.c.l.bf16 %v896
        %v937 = vunpack.c.l.bf16 %v897
        %v938 = vunpack.c.l.bf16 %v898
        %v939 = vunpack.c.l.bf16 %v899
        %v940 = vunpack.c.l.bf16 %v900
        %v941 = vunpack.c.l.bf16 %v901
        %v942 = vunpack.c.l.bf16 %v902
        %v943 = vunpack.c.l.bf16 %v903
        %v944 = vunpack.c.l.bf16 %v904
        %v945 = vunpack.c.l.bf16 %v905
        %v946 = vunpack.c.l.bf16 %v906
        %v947 = vunpack.c.l.bf16 %v930
        %v948 = vmul.f32 %v931, %v947
        %v949 = vmul.f32 %v932, %v947
        %v950 = vmul.f32 %v933, %v947
        %v951 = vmul.f32 %v934, %v947
        %v952 = vmul.f32 %v935, %v947
        %v953 = vmul.f32 %v936, %v947
        %v954 = vmul.f32 %v937, %v947
        %v955 = vmul.f32 %v938, %v947
        %v956 = vmul.f32 %v939, %v947
        %v957 = vmul.f32 %v940, %v947
        %v958 = vmul.f32 %v941, %v947
        %v959 = vmul.f32 %v942, %v947
        %v960 = vmul.f32 %v943, %v947
        %v961 = vmul.f32 %v944, %v947
        %v962 = vmul.f32 %v945, %v947
        %v963 = vmul.f32 %v946, %v947
        %v964 = vpack.c.bf16 %v949, %v948
        %v965 = vpack.c.bf16 %v951, %v950
        %v966 = vpack.c.bf16 %v953, %v952
        %v967 = vpack.c.bf16 %v955, %v954
        %v968 = vpack.c.bf16 %v957, %v956
        %v969 = vpack.c.bf16 %v959, %v958
        %v970 = vpack.c.bf16 %v961, %v960
        %v971 = vpack.c.bf16 %v963, %v962
        %v972 = vunpack.c.l.bf16 %v964
        %v973 = vunpack.c.h.bf16 %v964
        %v974 = vunpack.c.l.bf16 %v965
        %v975 = vunpack.c.h.bf16 %v965
        %v976 = vunpack.c.l.bf16 %v966
        %v977 = vunpack.c.h.bf16 %v966
        %v978 = vunpack.c.l.bf16 %v967
        %v979 = vunpack.c.h.bf16 %v967
        %v980 = vunpack.c.l.bf16 %v968
        %v981 = vunpack.c.h.bf16 %v968
        %v982 = vunpack.c.l.bf16 %v969
        %v983 = vunpack.c.h.bf16 %v969
        %v984 = vunpack.c.l.bf16 %v970
        %v985 = vunpack.c.h.bf16 %v970
        %v986 = vunpack.c.l.bf16 %v971
        %v987 = vunpack.c.h.bf16 %v971
        %988 = vadd.xlane.f32.xlu0 %v972
        %v989 = vpop.xlane.xlu0 %988
        %990 = vadd.xlane.f32.xlu0 %v973
        %v991 = vpop.xlane.xlu0 %990
        %992 = vadd.xlane.f32.xlu0 %v974
        %v993 = vpop.xlane.xlu0 %992
        %994 = vadd.xlane.f32.xlu0 %v975
        %v995 = vpop.xlane.xlu0 %994
        %996 = vadd.xlane.f32.xlu0 %v976
        %v997 = vpop.xlane.xlu0 %996
        %998 = vadd.xlane.f32.xlu0 %v977
        %v999 = vpop.xlane.xlu0 %998
        %1000 = vadd.xlane.f32.xlu0 %v978
        %v1001 = vpop.xlane.xlu0 %1000
        %1002 = vadd.xlane.f32.xlu0 %v979
        %v1003 = vpop.xlane.xlu0 %1002
        %1004 = vadd.xlane.f32.xlu0 %v980
        %v1005 = vpop.xlane.xlu0 %1004
        %1006 = vadd.xlane.f32.xlu0 %v981
        %v1007 = vpop.xlane.xlu0 %1006
        %1008 = vadd.xlane.f32.xlu0 %v982
        %v1009 = vpop.xlane.xlu0 %1008
        %1010 = vadd.xlane.f32.xlu0 %v983
        %v1011 = vpop.xlane.xlu0 %1010
        %1012 = vadd.xlane.f32.xlu0 %v984
        %v1013 = vpop.xlane.xlu0 %1012
        %1014 = vadd.xlane.f32.xlu0 %v985
        %v1015 = vpop.xlane.xlu0 %1014
        %1016 = vadd.xlane.f32.xlu0 %v986
        %v1017 = vpop.xlane.xlu0 %1016
        %1018 = vadd.xlane.f32.xlu0 %v987
        %v1019 = vpop.xlane.xlu0 %1018
        %v1020 = vadd.f32 %v989, 1e-20
        %v1021 = vadd.f32 %v991, 1e-20
        %v1022 = vadd.f32 %v993, 1e-20
        %v1023 = vadd.f32 %v995, 1e-20
        %v1024 = vadd.f32 %v997, 1e-20
        %v1025 = vadd.f32 %v999, 1e-20
        %v1026 = vadd.f32 %v1001, 1e-20
        %v1027 = vadd.f32 %v1003, 1e-20
        %v1028 = vadd.f32 %v1005, 1e-20
        %v1029 = vadd.f32 %v1007, 1e-20
        %v1030 = vadd.f32 %v1009, 1e-20
        %v1031 = vadd.f32 %v1011, 1e-20
        %v1032 = vadd.f32 %v1013, 1e-20
        %v1033 = vadd.f32 %v1015, 1e-20
        %v1034 = vadd.f32 %v1017, 1e-20
        %v1035 = vadd.f32 %v1019, 1e-20
        %v1036 = vrcp.pop %v1020
        %v1037 = vmul.f32 %v1020, %v1036
        %v1038 = vsub.f32 1.0, %v1037
        %v1039 = vmul.f32 %v1036, %v1038
        %v1040 = vadd.f32 %v1036, %v1039
        %vm1041 = vweird.f32 %v1020
        %vm1042 = vweird.f32 %v1036
        %vm1043 = vmor %vm1041, %vm1042
        %v1044 = vsel %vm1043, %v1036, %v1040
        %v1045 = vand.u32 2147483647, %v1020
        %vm1046 = vcmp.eq.f32.partialorder %v1045, 8.507059e+37
        %v1047 = vand.u32 %v1020, 2147483648
        %v1048 = vor.u32 1.1754944e-38, %v1047
        %v1049 = vsel %vm1046, %v1048, %v1044
        %v1050 = vrcp.pop %v1021
        %v1051 = vmul.f32 %v1021, %v1050
        %v1052 = vsub.f32 1.0, %v1051
        %v1053 = vmul.f32 %v1050, %v1052
        %v1054 = vadd.f32 %v1050, %v1053
        %vm1055 = vweird.f32 %v1021
        %vm1056 = vweird.f32 %v1050
        %vm1057 = vmor %vm1055, %vm1056
        %v1058 = vsel %vm1057, %v1050, %v1054
        %v1059 = vand.u32 2147483647, %v1021
        %vm1060 = vcmp.eq.f32.partialorder %v1059, 8.507059e+37
        %v1061 = vand.u32 %v1021, 2147483648
        %v1062 = vor.u32 1.1754944e-38, %v1061
        %v1063 = vsel %vm1060, %v1062, %v1058
        %v1064 = vrcp.pop %v1022
        %v1065 = vmul.f32 %v1022, %v1064
        %v1066 = vsub.f32 1.0, %v1065
        %v1067 = vmul.f32 %v1064, %v1066
        %v1068 = vadd.f32 %v1064, %v1067
        %vm1069 = vweird.f32 %v1022
        %vm1070 = vweird.f32 %v1064
        %vm1071 = vmor %vm1069, %vm1070
        %v1072 = vsel %vm1071, %v1064, %v1068
        %v1073 = vand.u32 2147483647, %v1022
        %vm1074 = vcmp.eq.f32.partialorder %v1073, 8.507059e+37
        %v1075 = vand.u32 %v1022, 2147483648
        %v1076 = vor.u32 1.1754944e-38, %v1075
        %v1077 = vsel %vm1074, %v1076, %v1072
        %v1078 = vrcp.pop %v1023
        %v1079 = vmul.f32 %v1023, %v1078
        %v1080 = vsub.f32 1.0, %v1079
        %v1081 = vmul.f32 %v1078, %v1080
        %v1082 = vadd.f32 %v1078, %v1081
        %vm1083 = vweird.f32 %v1023
        %vm1084 = vweird.f32 %v1078
        %vm1085 = vmor %vm1083, %vm1084
        %v1086 = vsel %vm1085, %v1078, %v1082
        %v1087 = vand.u32 2147483647, %v1023
        %vm1088 = vcmp.eq.f32.partialorder %v1087, 8.507059e+37
        %v1089 = vand.u32 %v1023, 2147483648
        %v1090 = vor.u32 1.1754944e-38, %v1089
        %v1091 = vsel %vm1088, %v1090, %v1086
        %v1092 = vrcp.pop %v1024
        %v1093 = vmul.f32 %v1024, %v1092
        %v1094 = vsub.f32 1.0, %v1093
        %v1095 = vmul.f32 %v1092, %v1094
        %v1096 = vadd.f32 %v1092, %v1095
        %vm1097 = vweird.f32 %v1024
        %vm1098 = vweird.f32 %v1092
        %vm1099 = vmor %vm1097, %vm1098
        %v1100 = vsel %vm1099, %v1092, %v1096
        %v1101 = vand.u32 2147483647, %v1024
        %vm1102 = vcmp.eq.f32.partialorder %v1101, 8.507059e+37
        %v1103 = vand.u32 %v1024, 2147483648
        %v1104 = vor.u32 1.1754944e-38, %v1103
        %v1105 = vsel %vm1102, %v1104, %v1100
        %v1106 = vrcp.pop %v1025
        %v1107 = vmul.f32 %v1025, %v1106
        %v1108 = vsub.f32 1.0, %v1107
        %v1109 = vmul.f32 %v1106, %v1108
        %v1110 = vadd.f32 %v1106, %v1109
        %vm1111 = vweird.f32 %v1025
        %vm1112 = vweird.f32 %v1106
        %vm1113 = vmor %vm1111, %vm1112
        %v1114 = vsel %vm1113, %v1106, %v1110
        %v1115 = vand.u32 2147483647, %v1025
        %vm1116 = vcmp.eq.f32.partialorder %v1115, 8.507059e+37
        %v1117 = vand.u32 %v1025, 2147483648
        %v1118 = vor.u32 1.1754944e-38, %v1117
        %v1119 = vsel %vm1116, %v1118, %v1114
        %v1120 = vrcp.pop %v1026
        %v1121 = vmul.f32 %v1026, %v1120
        %v1122 = vsub.f32 1.0, %v1121
        %v1123 = vmul.f32 %v1120, %v1122
        %v1124 = vadd.f32 %v1120, %v1123
        %vm1125 = vweird.f32 %v1026
        %vm1126 = vweird.f32 %v1120
        %vm1127 = vmor %vm1125, %vm1126
        %v1128 = vsel %vm1127, %v1120, %v1124
        %v1129 = vand.u32 2147483647, %v1026
        %vm1130 = vcmp.eq.f32.partialorder %v1129, 8.507059e+37
        %v1131 = vand.u32 %v1026, 2147483648
        %v1132 = vor.u32 1.1754944e-38, %v1131
        %v1133 = vsel %vm1130, %v1132, %v1128
        %v1134 = vrcp.pop %v1027
        %v1135 = vmul.f32 %v1027, %v1134
        %v1136 = vsub.f32 1.0, %v1135
        %v1137 = vmul.f32 %v1134, %v1136
        %v1138 = vadd.f32 %v1134, %v1137
        %vm1139 = vweird.f32 %v1027
        %vm1140 = vweird.f32 %v1134
        %vm1141 = vmor %vm1139, %vm1140
        %v1142 = vsel %vm1141, %v1134, %v1138
        %v1143 = vand.u32 2147483647, %v1027
        %vm1144 = vcmp.eq.f32.partialorder %v1143, 8.507059e+37
        %v1145 = vand.u32 %v1027, 2147483648
        %v1146 = vor.u32 1.1754944e-38, %v1145
        %v1147 = vsel %vm1144, %v1146, %v1142
        %v1148 = vrcp.pop %v1028
        %v1149 = vmul.f32 %v1028, %v1148
        %v1150 = vsub.f32 1.0, %v1149
        %v1151 = vmul.f32 %v1148, %v1150
        %v1152 = vadd.f32 %v1148, %v1151
        %vm1153 = vweird.f32 %v1028
        %vm1154 = vweird.f32 %v1148
        %vm1155 = vmor %vm1153, %vm1154
        %v1156 = vsel %vm1155, %v1148, %v1152
        %v1157 = vand.u32 2147483647, %v1028
        %vm1158 = vcmp.eq.f32.partialorder %v1157, 8.507059e+37
        %v1159 = vand.u32 %v1028, 2147483648
        %v1160 = vor.u32 1.1754944e-38, %v1159
        %v1161 = vsel %vm1158, %v1160, %v1156
        %v1162 = vrcp.pop %v1029
        %v1163 = vmul.f32 %v1029, %v1162
        %v1164 = vsub.f32 1.0, %v1163
        %v1165 = vmul.f32 %v1162, %v1164
        %v1166 = vadd.f32 %v1162, %v1165
        %vm1167 = vweird.f32 %v1029
        %vm1168 = vweird.f32 %v1162
        %vm1169 = vmor %vm1167, %vm1168
        %v1170 = vsel %vm1169, %v1162, %v1166
        %v1171 = vand.u32 2147483647, %v1029
        %vm1172 = vcmp.eq.f32.partialorder %v1171, 8.507059e+37
        %v1173 = vand.u32 %v1029, 2147483648
        %v1174 = vor.u32 1.1754944e-38, %v1173
        %v1175 = vsel %vm1172, %v1174, %v1170
        %v1176 = vrcp.pop %v1030
        %v1177 = vmul.f32 %v1030, %v1176
        %v1178 = vsub.f32 1.0, %v1177
        %v1179 = vmul.f32 %v1176, %v1178
        %v1180 = vadd.f32 %v1176, %v1179
        %vm1181 = vweird.f32 %v1030
        %vm1182 = vweird.f32 %v1176
        %vm1183 = vmor %vm1181, %vm1182
        %v1184 = vsel %vm1183, %v1176, %v1180
        %v1185 = vand.u32 2147483647, %v1030
        %vm1186 = vcmp.eq.f32.partialorder %v1185, 8.507059e+37
        %v1187 = vand.u32 %v1030, 2147483648
        %v1188 = vor.u32 1.1754944e-38, %v1187
        %v1189 = vsel %vm1186, %v1188, %v1184
        %v1190 = vrcp.pop %v1031
        %v1191 = vmul.f32 %v1031, %v1190
        %v1192 = vsub.f32 1.0, %v1191
        %v1193 = vmul.f32 %v1190, %v1192
        %v1194 = vadd.f32 %v1190, %v1193
        %vm1195 = vweird.f32 %v1031
        %vm1196 = vweird.f32 %v1190
        %vm1197 = vmor %vm1195, %vm1196
        %v1198 = vsel %vm1197, %v1190, %v1194
        %v1199 = vand.u32 2147483647, %v1031
        %vm1200 = vcmp.eq.f32.partialorder %v1199, 8.507059e+37
        %v1201 = vand.u32 %v1031, 2147483648
        %v1202 = vor.u32 1.1754944e-38, %v1201
        %v1203 = vsel %vm1200, %v1202, %v1198
        %v1204 = vrcp.pop %v1032
        %v1205 = vmul.f32 %v1032, %v1204
        %v1206 = vsub.f32 1.0, %v1205
        %v1207 = vmul.f32 %v1204, %v1206
        %v1208 = vadd.f32 %v1204, %v1207
        %vm1209 = vweird.f32 %v1032
        %vm1210 = vweird.f32 %v1204
        %vm1211 = vmor %vm1209, %vm1210
        %v1212 = vsel %vm1211, %v1204, %v1208
        %v1213 = vand.u32 2147483647, %v1032
        %vm1214 = vcmp.eq.f32.partialorder %v1213, 8.507059e+37
        %v1215 = vand.u32 %v1032, 2147483648
        %v1216 = vor.u32 1.1754944e-38, %v1215
        %v1217 = vsel %vm1214, %v1216, %v1212
        %v1218 = vrcp.pop %v1033
        %v1219 = vmul.f32 %v1033, %v1218
        %v1220 = vsub.f32 1.0, %v1219
        %v1221 = vmul.f32 %v1218, %v1220
        %v1222 = vadd.f32 %v1218, %v1221
        %vm1223 = vweird.f32 %v1033
        %vm1224 = vweird.f32 %v1218
        %vm1225 = vmor %vm1223, %vm1224
        %v1226 = vsel %vm1225, %v1218, %v1222
        %v1227 = vand.u32 2147483647, %v1033
        %vm1228 = vcmp.eq.f32.partialorder %v1227, 8.507059e+37
        %v1229 = vand.u32 %v1033, 2147483648
        %v1230 = vor.u32 1.1754944e-38, %v1229
        %v1231 = vsel %vm1228, %v1230, %v1226
        %v1232 = vrcp.pop %v1034
        %v1233 = vmul.f32 %v1034, %v1232
        %v1234 = vsub.f32 1.0, %v1233
        %v1235 = vmul.f32 %v1232, %v1234
        %v1236 = vadd.f32 %v1232, %v1235
        %vm1237 = vweird.f32 %v1034
        %vm1238 = vweird.f32 %v1232
        %vm1239 = vmor %vm1237, %vm1238
        %v1240 = vsel %vm1239, %v1232, %v1236
        %v1241 = vand.u32 2147483647, %v1034
        %vm1242 = vcmp.eq.f32.partialorder %v1241, 8.507059e+37
        %v1243 = vand.u32 %v1034, 2147483648
        %v1244 = vor.u32 1.1754944e-38, %v1243
        %v1245 = vsel %vm1242, %v1244, %v1240
        %v1246 = vrcp.pop %v1035
        %v1247 = vmul.f32 %v1035, %v1246
        %v1248 = vsub.f32 1.0, %v1247
        %v1249 = vmul.f32 %v1246, %v1248
        %v1250 = vadd.f32 %v1246, %v1249
        %vm1251 = vweird.f32 %v1035
        %vm1252 = vweird.f32 %v1246
        %vm1253 = vmor %vm1251, %vm1252
        %v1254 = vsel %vm1253, %v1246, %v1250
        %v1255 = vand.u32 2147483647, %v1035
        %vm1256 = vcmp.eq.f32.partialorder %v1255, 8.507059e+37
        %v1257 = vand.u32 %v1035, 2147483648
        %v1258 = vor.u32 1.1754944e-38, %v1257
        %v1259 = vsel %vm1256, %v1258, %v1254
        %v1260 = vpack.c.bf16 %v1049, %v1049
        %v1261 = vpack.c.bf16 %v1063, %v1063
        %v1262 = vpack.c.bf16 %v1077, %v1077
        %v1263 = vpack.c.bf16 %v1091, %v1091
        %v1264 = vpack.c.bf16 %v1105, %v1105
        %v1265 = vpack.c.bf16 %v1119, %v1119
        %v1266 = vpack.c.bf16 %v1133, %v1133
        %v1267 = vpack.c.bf16 %v1147, %v1147
        %v1268 = vpack.c.bf16 %v1161, %v1161
        %v1269 = vpack.c.bf16 %v1175, %v1175
        %v1270 = vpack.c.bf16 %v1189, %v1189
        %v1271 = vpack.c.bf16 %v1203, %v1203
        %v1272 = vpack.c.bf16 %v1217, %v1217
        %v1273 = vpack.c.bf16 %v1231, %v1231
        %v1274 = vpack.c.bf16 %v1245, %v1245
        %v1275 = vpack.c.bf16 %v1259, %v1259
        %v1276 = vunpack.c.l.bf16 %v1260
        %v1277 = vunpack.c.l.bf16 %v1261
        %v1278 = vunpack.c.l.bf16 %v1262
        %v1279 = vunpack.c.l.bf16 %v1263
        %v1280 = vunpack.c.l.bf16 %v1264
        %v1281 = vunpack.c.l.bf16 %v1265
        %v1282 = vunpack.c.l.bf16 %v1266
        %v1283 = vunpack.c.l.bf16 %v1267
        %v1284 = vunpack.c.l.bf16 %v1268
        %v1285 = vunpack.c.l.bf16 %v1269
        %v1286 = vunpack.c.l.bf16 %v1270
        %v1287 = vunpack.c.l.bf16 %v1271
        %v1288 = vunpack.c.l.bf16 %v1272
        %v1289 = vunpack.c.l.bf16 %v1273
        %v1290 = vunpack.c.l.bf16 %v1274
        %v1291 = vunpack.c.l.bf16 %v1275
        %v1292 = vmul.f32 %v931, %v1276
        %v1293 = vmul.f32 %v932, %v1277
        %v1294 = vmul.f32 %v933, %v1278
        %v1295 = vmul.f32 %v934, %v1279
        %v1296 = vmul.f32 %v935, %v1280
        %v1297 = vmul.f32 %v936, %v1281
        %v1298 = vmul.f32 %v937, %v1282
        %v1299 = vmul.f32 %v938, %v1283
        %v1300 = vmul.f32 %v939, %v1284
        %v1301 = vmul.f32 %v940, %v1285
        %v1302 = vmul.f32 %v941, %v1286
        %v1303 = vmul.f32 %v942, %v1287
        %v1304 = vmul.f32 %v943, %v1288
        %v1305 = vmul.f32 %v944, %v1289
        %v1306 = vmul.f32 %v945, %v1290
        %v1307 = vmul.f32 %v946, %v1291
        %v1308 = vpack.c.bf16 %v1293, %v1292
        %v1309 = vpack.c.bf16 %v1295, %v1294
        %v1310 = vpack.c.bf16 %v1297, %v1296
        %v1311 = vpack.c.bf16 %v1299, %v1298
        %v1312 = vpack.c.bf16 %v1301, %v1300
        %v1313 = vpack.c.bf16 %v1303, %v1302
        %v1314 = vpack.c.bf16 %v1305, %v1304
        %v1315 = vpack.c.bf16 %v1307, %v1306
        %v1316 = vunpack.c.l.bf16 %v1308
        %v1317 = vunpack.c.h.bf16 %v1308
        %v1318 = vunpack.c.l.bf16 %v1309
        %v1319 = vunpack.c.h.bf16 %v1309
        %v1320 = vunpack.c.l.bf16 %v1310
        %v1321 = vunpack.c.h.bf16 %v1310
        %v1322 = vunpack.c.l.bf16 %v1311
        %v1323 = vunpack.c.h.bf16 %v1311
        %v1324 = vunpack.c.l.bf16 %v1312
        %v1325 = vunpack.c.h.bf16 %v1312
        %v1326 = vunpack.c.l.bf16 %v1313
        %v1327 = vunpack.c.h.bf16 %v1313
        %v1328 = vunpack.c.l.bf16 %v1314
        %v1329 = vunpack.c.h.bf16 %v1314
        %v1330 = vunpack.c.l.bf16 %v1315
        %v1331 = vunpack.c.h.bf16 %v1315
        %v1332 = vadd.f32 %v1316, %v1317
        %v1333 = vadd.f32 %v1332, %v1318
        %v1334 = vadd.f32 %v1333, %v1319
        %v1335 = vadd.f32 %v1334, %v1320
        %v1336 = vadd.f32 %v1335, %v1321
        %v1337 = vadd.f32 %v1336, %v1322
        %v1338 = vadd.f32 %v1337, %v1323
        %v1339 = vadd.f32 %v1338, %v1324
        %v1340 = vadd.f32 %v1339, %v1325
        %v1341 = vadd.f32 %v1340, %v1326
        %v1342 = vadd.f32 %v1341, %v1327
        %v1343 = vadd.f32 %v1342, %v1328
        %v1344 = vadd.f32 %v1343, %v1329
        %v1345 = vadd.f32 %v1344, %v1330
        %v1346 = vadd.f32 %v1345, %v1331
        %v1347 = vrot.slane %v1346, 4
        %v1348 = vadd.f32 %v1346, %v1347
        %v1349 = vrot.slane %v1348, 2
        %v1350 = vadd.f32 %v1348, %v1349
        %v1351 = vrot.slane %v1350, 1
        %v1352 = vadd.f32 %v1350, %v1351
        %v1353 = vadd.f32 %v1352, 1e-20
        %v1354 = vrcp.pop %v1353
        %v1355 = vmul.f32 %v1353, %v1354
        %v1356 = vsub.f32 1.0, %v1355
        %v1357 = vmul.f32 %v1354, %v1356
        %v1358 = vadd.f32 %v1354, %v1357
        %vm1359 = vweird.f32 %v1353
        %vm1360 = vweird.f32 %v1354
        %vm1361 = vmor %vm1359, %vm1360
        %v1362 = vsel %vm1361, %v1354, %v1358
        %v1363 = vand.u32 2147483647, %v1353
        %vm1364 = vcmp.eq.f32.partialorder %v1363, 8.507059e+37
        %v1365 = vand.u32 %v1353, 2147483648
        %v1366 = vor.u32 1.1754944e-38, %v1365
        %v1367 = vsel %vm1364, %v1366, %v1362
      $region33: #{emd_loss.1} parent=27 // loop_footer
        %s912 = sadd.s32 1, %s908
      $region34: #{emd_loss.1} parent=27 // loop_footer_branch
        %907 = sbr.rel target = $region30
      $region35: #{emd_loss.1} parent=27 // loop_exit
        _
      %v1368 = vunpack.c.l.bf16 %v891
      %v1369 = vunpack.c.l.bf16 %v892
      %v1370 = vunpack.c.l.bf16 %v893
      %v1371 = vunpack.c.l.bf16 %v894
      %v1372 = vunpack.c.l.bf16 %v895
      %v1373 = vunpack.c.l.bf16 %v896
      %v1374 = vunpack.c.l.bf16 %v897
      %v1375 = vunpack.c.l.bf16 %v898
      %v1376 = vunpack.c.l.bf16 %v899
      %v1377 = vunpack.c.l.bf16 %v900
      %v1378 = vunpack.c.l.bf16 %v901
      %v1379 = vunpack.c.l.bf16 %v902
      %v1380 = vunpack.c.l.bf16 %v903
      %v1381 = vunpack.c.l.bf16 %v904
      %v1382 = vunpack.c.l.bf16 %v905
      %v1383 = vunpack.c.l.bf16 %v906
      %v1384 = vmul.f32 %v1368, %v614
      %v1385 = vmul.f32 %v1369, %v626
      %v1386 = vmul.f32 %v1370, %v638
      %v1387 = vmul.f32 %v1371, %v650
      %v1388 = vmul.f32 %v1372, %v662
      %v1389 = vmul.f32 %v1373, %v674
      %v1390 = vmul.f32 %v1374, %v686
      %v1391 = vmul.f32 %v1375, %v698
      %v1392 = vmul.f32 %v1376, %v710
      %v1393 = vmul.f32 %v1377, %v722
      %v1394 = vmul.f32 %v1378, %v734
      %v1395 = vmul.f32 %v1379, %v746
      %v1396 = vmul.f32 %v1380, %v758
      %v1397 = vmul.f32 %v1381, %v770
      %v1398 = vmul.f32 %v1382, %v782
      %v1399 = vmul.f32 %v1383, %v794
      %v1400 = vmul.f32 %v1384, %v929
      %v1401 = vmul.f32 %v1385, %v929
      %v1402 = vmul.f32 %v1386, %v929
      %v1403 = vmul.f32 %v1387, %v929
      %v1404 = vmul.f32 %v1388, %v929
      %v1405 = vmul.f32 %v1389, %v929
      %v1406 = vmul.f32 %v1390, %v929
      %v1407 = vmul.f32 %v1391, %v929
      %v1408 = vmul.f32 %v1392, %v929
      %v1409 = vmul.f32 %v1393, %v929
      %v1410 = vmul.f32 %v1394, %v929
      %v1411 = vmul.f32 %v1395, %v929
      %v1412 = vmul.f32 %v1396, %v929
      %v1413 = vmul.f32 %v1397, %v929
      %v1414 = vmul.f32 %v1398, %v929
      %v1415 = vmul.f32 %v1399, %v929
      %1416 = vadd.xlane.f32.xlu0 %v1400
      %v1417 = vpop.xlane.xlu0 %1416
      %1418 = vadd.xlane.f32.xlu0 %v1401
      %v1419 = vpop.xlane.xlu0 %1418
      %1420 = vadd.xlane.f32.xlu0 %v1402
      %v1421 = vpop.xlane.xlu0 %1420
      %1422 = vadd.xlane.f32.xlu0 %v1403
      %v1423 = vpop.xlane.xlu0 %1422
      %1424 = vadd.xlane.f32.xlu0 %v1404
      %v1425 = vpop.xlane.xlu0 %1424
      %1426 = vadd.xlane.f32.xlu0 %v1405
      %v1427 = vpop.xlane.xlu0 %1426
      %1428 = vadd.xlane.f32.xlu0 %v1406
      %v1429 = vpop.xlane.xlu0 %1428
      %1430 = vadd.xlane.f32.xlu0 %v1407
      %v1431 = vpop.xlane.xlu0 %1430
      %1432 = vadd.xlane.f32.xlu0 %v1408
      %v1433 = vpop.xlane.xlu0 %1432
      %1434 = vadd.xlane.f32.xlu0 %v1409
      %v1435 = vpop.xlane.xlu0 %1434
      %1436 = vadd.xlane.f32.xlu0 %v1410
      %v1437 = vpop.xlane.xlu0 %1436
      %1438 = vadd.xlane.f32.xlu0 %v1411
      %v1439 = vpop.xlane.xlu0 %1438
      %1440 = vadd.xlane.f32.xlu0 %v1412
      %v1441 = vpop.xlane.xlu0 %1440
      %1442 = vadd.xlane.f32.xlu0 %v1413
      %v1443 = vpop.xlane.xlu0 %1442
      %1444 = vadd.xlane.f32.xlu0 %v1414
      %v1445 = vpop.xlane.xlu0 %1444
      %1446 = vadd.xlane.f32.xlu0 %v1415
      %v1447 = vpop.xlane.xlu0 %1446
      %v1448 = vmul.f32 %v1417, %v913
      %v1449 = vmul.f32 %v1419, %v914
      %v1450 = vmul.f32 %v1421, %v915
      %v1451 = vmul.f32 %v1423, %v916
      %v1452 = vmul.f32 %v1425, %v917
      %v1453 = vmul.f32 %v1427, %v918
      %v1454 = vmul.f32 %v1429, %v919
      %v1455 = vmul.f32 %v1431, %v920
      %v1456 = vmul.f32 %v1433, %v921
      %v1457 = vmul.f32 %v1435, %v922
      %v1458 = vmul.f32 %v1437, %v923
      %v1459 = vmul.f32 %v1439, %v924
      %v1460 = vmul.f32 %v1441, %v925
      %v1461 = vmul.f32 %v1443, %v926
      %v1462 = vmul.f32 %v1445, %v927
      %v1463 = vmul.f32 %v1447, %v928
      %v1464 = vadd.f32 %v1448, %v1449
      %v1465 = vadd.f32 %v1464, %v1450
      %v1466 = vadd.f32 %v1465, %v1451
      %v1467 = vadd.f32 %v1466, %v1452
      %v1468 = vadd.f32 %v1467, %v1453
      %v1469 = vadd.f32 %v1468, %v1454
      %v1470 = vadd.f32 %v1469, %v1455
      %v1471 = vadd.f32 %v1470, %v1456
      %v1472 = vadd.f32 %v1471, %v1457
      %v1473 = vadd.f32 %v1472, %v1458
      %v1474 = vadd.f32 %v1473, %v1459
      %v1475 = vadd.f32 %v1474, %v1460
      %v1476 = vadd.f32 %v1475, %v1461
      %v1477 = vadd.f32 %v1476, %v1462
      %v1478 = vadd.f32 %v1477, %v1463
      %v1479 = vrot.slane %v1478, 4
      %v1480 = vadd.f32 %v1478, %v1479
      %v1481 = vrot.slane %v1480, 2
      %v1482 = vadd.f32 %v1480, %v1481
      %v1483 = vrot.slane %v1482, 1
      %v1484 = vadd.f32 %v1482, %v1483
      %1485 = vst [vmem:[%s156] sm:$0x1] %v1484
      %p1486 = scmp.lt.s32.totalorder %s13, 1
      %s1487 = scalar_select %p1486, %s13, 1
      %s1488 = scalar_lea.vmem %s2, %s1487
      // Predicated region
      $region36: #{emd_loss.1} parent=27 // pred_check
        %p1489 = pneg %p83
      $region37: #{emd_loss.1} parent=27 // pred_check_branch
        %1491 = sbr.rel (%p1489) target = $region39
      $region38: #{emd_loss.1} parent=27 // pred_region
        _
      $region39: #{emd_loss.1} parent=27 // pred_fallthru
        _
    $region28: #{emd_loss.1} parent=5 // pred_fallthru
      _
    %p1492 = scmp.le.s32.totalorder 2, %s8
    // Predicated region
    $region40: #{emd_loss.1} parent=5 // pred_check
      %p1493 = pneg %p1492
    $region41: #{emd_loss.1} parent=5 // pred_check_branch
      %1495 = sbr.rel (%p1493) target = $region43
    $region42: #{emd_loss.1} parent=5 // pred_region
      %s1496 = ssub.s32 %s8, 2
      // Predicated region
      $region44: #{emd_loss.1} parent=42 // pred_check
        %p1497 = pneg %p89
      $region45: #{emd_loss.1} parent=42 // pred_check_branch
        %1499 = sbr.rel (%p1497) target = $region47
      $region46: #{emd_loss.1} parent=42 // pred_region
        %p1500 = scmp.lt.s32.totalorder %s14, 1
        %s1501 = scalar_select %p1500, %s14, 1
        %s1502 = scalar_lea.vmem %s2, %s1501
      $region47: #{emd_loss.1} parent=42 // pred_fallthru
        _
    $region43: #{emd_loss.1} parent=5 // pred_fallthru
      _
  $region6: #{emd_loss.1} parent=0 // loop_footer
    %s12 = sadd.s32 1, %s8
  $region7: #{emd_loss.1} parent=0 // loop_footer_branch
    %7 = sbr.rel target = $region3
  $region8: #{emd_loss.1} parent=0 // loop_exit
    _

</llo_original>
